<compile_context>
chip_gen: v7x
topology: tpu7x:2x2x1
jax: 0.10.0
libtpu: 0.0.40
codegen_flags: <defaults>
</compile_context>

<pallas_src>
import functools
import math

import jax
import jax.numpy as jnp
from jax.experimental import pallas as pl
from jax.experimental.pallas import tpu as pltpu

# Module hyper-parameters (small, consistent with the PyTorch __init__).
D_MODEL = 32
D_FF = 64
HEADS = 4
EPS = 1e-5


def _layer_norm(x, gamma, beta, eps):
    # PyTorch LayerNorm: biased variance over the last dim (f32).
    mean = jnp.mean(x, axis=-1, keepdims=True)
    var = jnp.mean((x - mean) ** 2, axis=-1, keepdims=True)
    return (x - mean) * jax.lax.rsqrt(var + eps) * gamma + beta


def encoder_layer_kernel(x_ref, wqkv_ref, bqkv_ref, wo_ref, w1_ref, b1_ref,
                         w2_ref, vec_ref, hmask_ref, o_ref, *, seq_len):
    # vec_ref rows: 0=bo, 1=gamma1, 2=beta1, 3=b2, 4=gamma2, 5=beta2
    rows, d = x_ref.shape                       # rows = tb * seq_len
    tb = rows // seq_len
    dk = d // HEADS
    scale = 1.0 / math.sqrt(dk)

    x2 = x_ref[...]                             # (rows, D) f32
    xb = x2.astype(jnp.bfloat16)

    # --- fused QKV projection: one MXU push instead of three ---------------
    qkv = jnp.dot(xb, wqkv_ref[...],
                  preferred_element_type=jnp.float32) + bqkv_ref[...]
    qkv_b = qkv.astype(jnp.bfloat16)            # (rows, 3D)

    # Slice q/k/v once (3 lane slices total, not 12).
    q3 = qkv_b[:, 0:d].reshape(tb, seq_len, d)  # leading-dim split (free)
    k2 = qkv_b[:, d:2 * d]                      # (rows, D)
    v2 = qkv_b[:, 2 * d:3 * d]                  # (rows, D)

    # --- multi-head self attention ------------------------------------------
    # Heads are selected by lane masks; each head's context lands in its own
    # dk lanes, so summing over heads reconstructs the concatenated context
    # and a single K=32 Wo matmul replaces the per-head K=8 folds.
    ctx = jnp.zeros((tb, seq_len, d), jnp.float32)
    for h in range(HEADS):                      # static unroll, mask-based
        m = hmask_ref[h:h + 1, :]               # (1, D) bf16, ones on head h
        kh = (k2 * m).reshape(tb, seq_len, d)
        vh = (v2 * m).reshape(tb, seq_len, d)

        sc = jnp.einsum('bqd,bkd->bqk', q3, kh,
                        preferred_element_type=jnp.float32) * scale
        sc = sc - jnp.max(sc, axis=-1, keepdims=True)
        p = jnp.exp(sc)
        p = p * pl.reciprocal(jnp.sum(p, axis=-1, keepdims=True), approx=True)

        ctx = ctx + jnp.einsum('bqk,bkd->bqd', p.astype(jnp.bfloat16), vh,
                               preferred_element_type=jnp.float32)

    attn = jnp.dot(ctx.reshape(rows, d).astype(jnp.bfloat16), wo_ref[...],
                   preferred_element_type=jnp.float32) + vec_ref[0:1, :]

    # residual + LayerNorm (dropout == identity in eval mode)
    y1 = _layer_norm(attn + x2, vec_ref[1:2, :], vec_ref[2:3, :], EPS)

    # --- position-wise feed forward -----------------------------------------
    h1 = jnp.dot(y1.astype(jnp.bfloat16), w1_ref[...],
                 preferred_element_type=jnp.float32) + b1_ref[...]
    h1 = jnp.maximum(h1, 0.0)
    h2 = jnp.dot(h1.astype(jnp.bfloat16), w2_ref[...],
                 preferred_element_type=jnp.float32) + vec_ref[3:4, :]

    y2 = _layer_norm(h2 + y1, vec_ref[4:5, :], vec_ref[5:6, :], EPS)
    o_ref[...] = y2.astype(o_ref.dtype)


def _cores_per_chip():
    """2 TensorCores on v7x / v4 / v5p; 1 on v5e / v6e."""
    try:
        kind = jax.devices()[0].device_kind.lower()
    except Exception:
        return 1
    return 2 if ("v7" in kind or "v4" in kind or "v5p" in kind) else 1


def _pick_block_batch(B, S, cores, target_rows=8192):
    """Sequences per grid step.

    One fat block per TensorCore: big enough to amortize the ~0.35us per-step
    overhead and fill the MXU M dimension; only split the grid when the chip
    actually has >1 TensorCore.  Awkward B is handled by padding (wrapper)."""
    tb = max(1, min(B, target_rows // max(S, 1)))
    if cores > 1:
        tb = min(tb, pl.cdiv(B, cores))         # >= `cores` grid steps
    # Block sublane dim (tb*S) must be a multiple of 8 when the grid has >1
    # step; round tb up (padding covers the overshoot).
    mult = 8 // math.gcd(S, 8)
    tb = pl.cdiv(tb, mult) * mult
    return tb


def transformer_encoder_layer(x, params):
    B, S, D = x.shape

    # --- pack / fuse parameters in the wrapper (cheap one-off XLA ops) ------
    wqkv = jnp.concatenate([params["wq"], params["wk"], params["wv"]],
                           axis=1).astype(jnp.bfloat16)            # (D, 3D)
    bqkv = jnp.concatenate([params["bq"], params["bk"], params["bv"]],
                           axis=1)                                 # (1, 3D) f32
    wo = params["wo"].astype(jnp.bfloat16)                         # (D, D)
    w1 = params["w1"].astype(jnp.bfloat16)                         # (D, D_FF)
    b1 = params["b1"]                                              # (1, D_FF)
    w2 = params["w2"].astype(jnp.bfloat16)                         # (D_FF, D)
    vecs = jnp.concatenate([params["bo"], params["g1"], params["be1"],
                            params["b2"], params["g2"], params["be2"]],
                           axis=0)                                 # (6, D) f32
    # Per-head lane masks: row h has ones on lanes [h*dk, (h+1)*dk).
    hmask = jnp.repeat(jnp.eye(HEADS, dtype=jnp.float32),
                       D // HEADS, axis=1).astype(jnp.bfloat16)    # (HEADS, D)

    cores = _cores_per_chip()
    tb = _pick_block_batch(B, S, cores)
    B_pad = pl.cdiv(B, tb) * tb
    if B_pad != B:                               # pad instead of shrinking tb
        x = jnp.concatenate(
            [x, jnp.zeros((B_pad - B, S, D), x.dtype)], axis=0)

    x2 = x.reshape(B_pad * S, D)                 # wrapper-side flatten (free)
    rows_blk = tb * S
    grid = (B_pad // tb,)

    weights = (wqkv, bqkv, wo, w1, b1, w2, vecs, hmask)
    in_specs = [pl.BlockSpec((rows_blk, D), lambda b: (b, 0))] + \
               [pl.BlockSpec(w.shape, lambda b: (0, 0)) for w in weights]

    kernel = functools.partial(encoder_layer_kernel, seq_len=S)

    out2 = pl.pallas_call(
        kernel,
        out_shape=jax.ShapeDtypeStruct((B_pad * S, D), x.dtype),
        grid=grid,
        in_specs=in_specs,
        out_specs=pl.BlockSpec((rows_blk, D), lambda b: (b, 0)),
        compiler_params=pltpu.CompilerParams(
            dimension_semantics=("parallel",)),
    )(x2, *weights)

    return out2.reshape(B_pad, S, D)[:B]


def init_params(key):
    ks = jax.random.split(key, 8)
    p = {}
    p["wq"] = 0.1 * jax.random.normal(ks[0], (D_MODEL, D_MODEL), jnp.float32)
    p["wk"] = 0.1 * jax.random.normal(ks[1], (D_MODEL, D_MODEL), jnp.float32)
    p["wv"] = 0.1 * jax.random.normal(ks[2], (D_MODEL, D_MODEL), jnp.float32)
    p["wo"] = 0.1 * jax.random.normal(ks[3], (D_MODEL, D_MODEL), jnp.float32)
    p["bq"] = jnp.zeros((1, D_MODEL), jnp.float32)
    p["bk"] = jnp.zeros((1, D_MODEL), jnp.float32)
    p["bv"] = jnp.zeros((1, D_MODEL), jnp.float32)
    p["bo"] = 0.01 * jax.random.normal(ks[4], (1, D_MODEL), jnp.float32)
    p["g1"] = jnp.ones((1, D_MODEL), jnp.float32)
    p["be1"] = jnp.zeros((1, D_MODEL), jnp.float32)
    p["w1"] = 0.1 * jax.random.normal(ks[5], (D_MODEL, D_FF), jnp.float32)
    p["b1"] = 0.01 * jax.random.normal(ks[6], (1, D_FF), jnp.float32)
    p["w2"] = 0.1 * jax.random.normal(ks[7], (D_FF, D_MODEL), jnp.float32)
    p["b2"] = jnp.zeros((1, D_MODEL), jnp.float32)
    p["g2"] = jnp.ones((1, D_MODEL), jnp.float32)
    p["be2"] = jnp.zeros((1, D_MODEL), jnp.float32)
    return p


def reference(x, p):
    """Plain-JAX f32 reference of the same forward pass (for verification)."""
    B, S, D = x.shape
    dk = D_MODEL // HEADS
    q = x @ p["wq"] + p["bq"]
    k = x @ p["wk"] + p["bk"]
    v = x @ p["wv"] + p["bv"]

    def split(t):  # (B,S,D) -> (B,H,S,dk)
        return t.reshape(B, S, HEADS, dk).transpose(0, 2, 1, 3)

    qh, kh, vh = split(q), split(k), split(v)
    s = jnp.einsum("bhqd,bhkd->bhqk", qh, kh) / math.sqrt(dk)
    pr = jax.nn.softmax(s, axis=-1)
    a = jnp.einsum("bhqk,bhkd->bhqd", pr, vh).transpose(0, 2, 1, 3).reshape(B, S, D)
    a = a @ p["wo"] + p["bo"]

    def ln(t, g, be):
        m = jnp.mean(t, -1, keepdims=True)
        var = jnp.mean((t - m) ** 2, -1, keepdims=True)
        return (t - m) / jnp.sqrt(var + EPS) * g + be

    y1 = ln(a + x, p["g1"], p["be1"])
    h = jnp.maximum(y1 @ p["w1"] + p["b1"], 0.0)
    h = h @ p["w2"] + p["b2"]
    return ln(h + y1, p["g2"], p["be2"])


if __name__ == "__main__":
    key = jax.random.PRNGKey(0)
    kx, kp = jax.random.split(key)
    B, S = 4, 8
    x = jax.random.normal(kx, (B, S, D_MODEL), jnp.float32)
    params = init_params(kp)

    out = transformer_encoder_layer(x, params)
    out = jax.block_until_ready(out)

    ref = reference(x, params)
    assert out.shape == (B, S, D_MODEL)
    # bf16 MXU operands + approx reciprocal -> compare with loosened tolerance
    # (intentional bf16-class accuracy, documented per review).
    assert jnp.allclose(out, ref, atol=5e-2, rtol=5e-2), "mismatch vs reference"
    print("KERNEL_OK")
</pallas_src>

<mosaic_0001>
module attributes {stable_mosaic.version = 11 : i64} {
  func.func @encoder_layer_kernel(%arg0: i32, %arg1: memref<32x32xf32, #tpu.memory_space<vmem>>, %arg2: memref<32x96xbf16, #tpu.memory_space<vmem>>, %arg3: memref<1x96xf32, #tpu.memory_space<vmem>>, %arg4: memref<32x32xbf16, #tpu.memory_space<vmem>>, %arg5: memref<32x64xbf16, #tpu.memory_space<vmem>>, %arg6: memref<1x64xf32, #tpu.memory_space<vmem>>, %arg7: memref<64x32xbf16, #tpu.memory_space<vmem>>, %arg8: memref<6x32xf32, #tpu.memory_space<vmem>>, %arg9: memref<4x32xbf16, #tpu.memory_space<vmem>>, %arg10: memref<32x32xf32, #tpu.memory_space<vmem>>) attributes {dimension_semantics = [#tpu.dimension_semantics<parallel>], iteration_bounds = array<i64: 1>, scalar_prefetch = 0 : i64, scratch_operands = 0 : i64, tpu.core_type = #tpu.core_type<tc>, window_params = [{transform_indices = @transform_0, window_bounds = array<i64: 32, 32>}, {pipeline_mode = #tpu.pipeline_mode<synchronous>, transform_indices = @transform_1, window_bounds = array<i64: 32, 96>}, {pipeline_mode = #tpu.pipeline_mode<synchronous>, transform_indices = @transform_2, window_bounds = array<i64: 1, 96>}, {pipeline_mode = #tpu.pipeline_mode<synchronous>, transform_indices = @transform_3, window_bounds = array<i64: 32, 32>}, {pipeline_mode = #tpu.pipeline_mode<synchronous>, transform_indices = @transform_4, window_bounds = array<i64: 32, 64>}, {pipeline_mode = #tpu.pipeline_mode<synchronous>, transform_indices = @transform_5, window_bounds = array<i64: 1, 64>}, {pipeline_mode = #tpu.pipeline_mode<synchronous>, transform_indices = @transform_6, window_bounds = array<i64: 64, 32>}, {pipeline_mode = #tpu.pipeline_mode<synchronous>, transform_indices = @transform_7, window_bounds = array<i64: 6, 32>}, {pipeline_mode = #tpu.pipeline_mode<synchronous>, transform_indices = @transform_8, window_bounds = array<i64: 4, 32>}, {transform_indices = @transform_9, window_bounds = array<i64: 32, 32>}]} {
    %c0 = arith.constant 0 : index
    %c0_0 = arith.constant 0 : index
    %0 = vector.load %arg1[%c0, %c0_0] : memref<32x32xf32, #tpu.memory_space<vmem>>, vector<32x32xf32>
    %1 = arith.truncf %0 : vector<32x32xf32> to vector<32x32xbf16>
    %c0_1 = arith.constant 0 : index
    %c0_2 = arith.constant 0 : index
    %2 = vector.load %arg2[%c0_1, %c0_2] : memref<32x96xbf16, #tpu.memory_space<vmem>>, vector<32x96xbf16>
    %cst = arith.constant dense<0.000000e+00> : vector<32x96xf32>
    %3 = tpu.matmul %1, %2, %cst {dimension_numbers = #tpu.dot_dimension_numbers<[1], [0], [0], [1], [0, 0, 1, 1], [], []>} : vector<32x32xbf16>, vector<32x96xbf16>, vector<32x96xf32> -> vector<32x96xf32>
    %c0_3 = arith.constant 0 : index
    %c0_4 = arith.constant 0 : index
    %4 = vector.load %arg3[%c0_3, %c0_4] : memref<1x96xf32, #tpu.memory_space<vmem>>, vector<1x96xf32>
    %5 = vector.broadcast %4 : vector<1x96xf32> to vector<32x96xf32>
    %6 = arith.addf %3, %5 : vector<32x96xf32>
    %7 = arith.truncf %6 : vector<32x96xf32> to vector<32x96xbf16>
    %8 = vector.extract_strided_slice %7 {offsets = [0, 0], sizes = [32, 32], strides = [1, 1]} : vector<32x96xbf16> to vector<32x32xbf16>
    %9 = vector.shape_cast %8 : vector<32x32xbf16> to vector<4x8x32xbf16>
    %10 = vector.extract_strided_slice %7 {offsets = [0, 32], sizes = [32, 32], strides = [1, 1]} : vector<32x96xbf16> to vector<32x32xbf16>
    %11 = vector.extract_strided_slice %7 {offsets = [0, 64], sizes = [32, 32], strides = [1, 1]} : vector<32x96xbf16> to vector<32x32xbf16>
    %cst_5 = arith.constant 0.000000e+00 : f32
    %12 = vector.broadcast %cst_5 : f32 to vector<4x8x32xf32>
    %c0_6 = arith.constant 0 : index
    %c0_7 = arith.constant 0 : index
    %13 = vector.load %arg9[%c0_6, %c0_7] : memref<4x32xbf16, #tpu.memory_space<vmem>>, vector<1x32xbf16>
    %14 = vector.broadcast %13 : vector<1x32xbf16> to vector<32x32xbf16>
    %15 = arith.mulf %10, %14 : vector<32x32xbf16>
    %16 = vector.shape_cast %15 : vector<32x32xbf16> to vector<4x8x32xbf16>
    %17 = vector.broadcast %13 : vector<1x32xbf16> to vector<32x32xbf16>
    %18 = arith.mulf %11, %17 : vector<32x32xbf16>
    %19 = vector.shape_cast %18 : vector<32x32xbf16> to vector<4x8x32xbf16>
    "tpu.trace_start"() <{level = 10 : i32, message = "bqd,bkd->bqk"}> : () -> ()
    %cst_8 = arith.constant dense<0.000000e+00> : vector<4x8x8xf32>
    %20 = tpu.matmul %9, %16, %cst_8 {dimension_numbers = #tpu.dot_dimension_numbers<[2], [2], [1], [1], [0, 0, 0, 1, 1, 1], [0], [0]>} : vector<4x8x32xbf16>, vector<4x8x32xbf16>, vector<4x8x8xf32> -> vector<4x8x8xf32>
    "tpu.trace_stop"() : () -> ()
    %cst_9 = arith.constant 0.353553385 : f32
    %21 = vector.broadcast %cst_9 : f32 to vector<4x8x8xf32>
    %22 = arith.mulf %20, %21 : vector<4x8x8xf32>
    %cst_10 = arith.constant dense<0xFF800000> : vector<4x8xf32>
    %23 = vector.multi_reduction <maximumf>, %22, %cst_10 [2] : vector<4x8x8xf32> to vector<4x8xf32>
    %24 = vector.shape_cast %23 : vector<4x8xf32> to vector<4x8x1xf32>
    %25 = vector.broadcast %24 : vector<4x8x1xf32> to vector<4x8x8xf32>
    %26 = arith.subf %22, %25 : vector<4x8x8xf32>
    %27 = math.exp %26 : vector<4x8x8xf32>
    %cst_11 = arith.constant dense<0.000000e+00> : vector<4x8xf32>
    %28 = vector.multi_reduction <add>, %27, %cst_11 [2] : vector<4x8x8xf32> to vector<4x8xf32>
    %29 = vector.shape_cast %28 : vector<4x8xf32> to vector<4x8x1xf32>
    %30 = tpu.reciprocal %29 {approx = true} : vector<4x8x1xf32> -> vector<4x8x1xf32>
    %31 = vector.broadcast %30 : vector<4x8x1xf32> to vector<4x8x8xf32>
    %32 = arith.mulf %27, %31 : vector<4x8x8xf32>
    %33 = arith.truncf %32 : vector<4x8x8xf32> to vector<4x8x8xbf16>
    "tpu.trace_start"() <{level = 10 : i32, message = "bqk,bkd->bqd"}> : () -> ()
    %cst_12 = arith.constant dense<0.000000e+00> : vector<4x8x32xf32>
    %34 = tpu.matmul %33, %19, %cst_12 {dimension_numbers = #tpu.dot_dimension_numbers<[2], [1], [1], [2], [0, 0, 0, 1, 1, 2], [0], [0]>} : vector<4x8x8xbf16>, vector<4x8x32xbf16>, vector<4x8x32xf32> -> vector<4x8x32xf32>
    "tpu.trace_stop"() : () -> ()
    %35 = arith.addf %12, %34 : vector<4x8x32xf32>
    %c1 = arith.constant 1 : index
    %c0_13 = arith.constant 0 : index
    %36 = vector.load %arg9[%c1, %c0_13] : memref<4x32xbf16, #tpu.memory_space<vmem>>, vector<1x32xbf16>
    %37 = vector.broadcast %36 : vector<1x32xbf16> to vector<32x32xbf16>
    %38 = arith.mulf %10, %37 : vector<32x32xbf16>
    %39 = vector.shape_cast %38 : vector<32x32xbf16> to vector<4x8x32xbf16>
    %40 = vector.broadcast %36 : vector<1x32xbf16> to vector<32x32xbf16>
    %41 = arith.mulf %11, %40 : vector<32x32xbf16>
    %42 = vector.shape_cast %41 : vector<32x32xbf16> to vector<4x8x32xbf16>
    "tpu.trace_start"() <{level = 10 : i32, message = "bqd,bkd->bqk"}> : () -> ()
    %cst_14 = arith.constant dense<0.000000e+00> : vector<4x8x8xf32>
    %43 = tpu.matmul %9, %39, %cst_14 {dimension_numbers = #tpu.dot_dimension_numbers<[2], [2], [1], [1], [0, 0, 0, 1, 1, 1], [0], [0]>} : vector<4x8x32xbf16>, vector<4x8x32xbf16>, vector<4x8x8xf32> -> vector<4x8x8xf32>
    "tpu.trace_stop"() : () -> ()
    %cst_15 = arith.constant 0.353553385 : f32
    %44 = vector.broadcast %cst_15 : f32 to vector<4x8x8xf32>
    %45 = arith.mulf %43, %44 : vector<4x8x8xf32>
    %cst_16 = arith.constant dense<0xFF800000> : vector<4x8xf32>
    %46 = vector.multi_reduction <maximumf>, %45, %cst_16 [2] : vector<4x8x8xf32> to vector<4x8xf32>
    %47 = vector.shape_cast %46 : vector<4x8xf32> to vector<4x8x1xf32>
    %48 = vector.broadcast %47 : vector<4x8x1xf32> to vector<4x8x8xf32>
    %49 = arith.subf %45, %48 : vector<4x8x8xf32>
    %50 = math.exp %49 : vector<4x8x8xf32>
    %cst_17 = arith.constant dense<0.000000e+00> : vector<4x8xf32>
    %51 = vector.multi_reduction <add>, %50, %cst_17 [2] : vector<4x8x8xf32> to vector<4x8xf32>
    %52 = vector.shape_cast %51 : vector<4x8xf32> to vector<4x8x1xf32>
    %53 = tpu.reciprocal %52 {approx = true} : vector<4x8x1xf32> -> vector<4x8x1xf32>
    %54 = vector.broadcast %53 : vector<4x8x1xf32> to vector<4x8x8xf32>
    %55 = arith.mulf %50, %54 : vector<4x8x8xf32>
    %56 = arith.truncf %55 : vector<4x8x8xf32> to vector<4x8x8xbf16>
    "tpu.trace_start"() <{level = 10 : i32, message = "bqk,bkd->bqd"}> : () -> ()
    %cst_18 = arith.constant dense<0.000000e+00> : vector<4x8x32xf32>
    %57 = tpu.matmul %56, %42, %cst_18 {dimension_numbers = #tpu.dot_dimension_numbers<[2], [1], [1], [2], [0, 0, 0, 1, 1, 2], [0], [0]>} : vector<4x8x8xbf16>, vector<4x8x32xbf16>, vector<4x8x32xf32> -> vector<4x8x32xf32>
    "tpu.trace_stop"() : () -> ()
    %58 = arith.addf %35, %57 : vector<4x8x32xf32>
    %c2 = arith.constant 2 : index
    %c0_19 = arith.constant 0 : index
    %59 = vector.load %arg9[%c2, %c0_19] : memref<4x32xbf16, #tpu.memory_space<vmem>>, vector<1x32xbf16>
    %60 = vector.broadcast %59 : vector<1x32xbf16> to vector<32x32xbf16>
    %61 = arith.mulf %10, %60 : vector<32x32xbf16>
    %62 = vector.shape_cast %61 : vector<32x32xbf16> to vector<4x8x32xbf16>
    %63 = vector.broadcast %59 : vector<1x32xbf16> to vector<32x32xbf16>
    %64 = arith.mulf %11, %63 : vector<32x32xbf16>
    %65 = vector.shape_cast %64 : vector<32x32xbf16> to vector<4x8x32xbf16>
    "tpu.trace_start"() <{level = 10 : i32, message = "bqd,bkd->bqk"}> : () -> ()
    %cst_20 = arith.constant dense<0.000000e+00> : vector<4x8x8xf32>
    %66 = tpu.matmul %9, %62, %cst_20 {dimension_numbers = #tpu.dot_dimension_numbers<[2], [2], [1], [1], [0, 0, 0, 1, 1, 1], [0], [0]>} : vector<4x8x32xbf16>, vector<4x8x32xbf16>, vector<4x8x8xf32> -> vector<4x8x8xf32>
    "tpu.trace_stop"() : () -> ()
    %cst_21 = arith.constant 0.353553385 : f32
    %67 = vector.broadcast %cst_21 : f32 to vector<4x8x8xf32>
    %68 = arith.mulf %66, %67 : vector<4x8x8xf32>
    %cst_22 = arith.constant dense<0xFF800000> : vector<4x8xf32>
    %69 = vector.multi_reduction <maximumf>, %68, %cst_22 [2] : vector<4x8x8xf32> to vector<4x8xf32>
    %70 = vector.shape_cast %69 : vector<4x8xf32> to vector<4x8x1xf32>
    %71 = vector.broadcast %70 : vector<4x8x1xf32> to vector<4x8x8xf32>
    %72 = arith.subf %68, %71 : vector<4x8x8xf32>
    %73 = math.exp %72 : vector<4x8x8xf32>
    %cst_23 = arith.constant dense<0.000000e+00> : vector<4x8xf32>
    %74 = vector.multi_reduction <add>, %73, %cst_23 [2] : vector<4x8x8xf32> to vector<4x8xf32>
    %75 = vector.shape_cast %74 : vector<4x8xf32> to vector<4x8x1xf32>
    %76 = tpu.reciprocal %75 {approx = true} : vector<4x8x1xf32> -> vector<4x8x1xf32>
    %77 = vector.broadcast %76 : vector<4x8x1xf32> to vector<4x8x8xf32>
    %78 = arith.mulf %73, %77 : vector<4x8x8xf32>
    %79 = arith.truncf %78 : vector<4x8x8xf32> to vector<4x8x8xbf16>
    "tpu.trace_start"() <{level = 10 : i32, message = "bqk,bkd->bqd"}> : () -> ()
    %cst_24 = arith.constant dense<0.000000e+00> : vector<4x8x32xf32>
    %80 = tpu.matmul %79, %65, %cst_24 {dimension_numbers = #tpu.dot_dimension_numbers<[2], [1], [1], [2], [0, 0, 0, 1, 1, 2], [0], [0]>} : vector<4x8x8xbf16>, vector<4x8x32xbf16>, vector<4x8x32xf32> -> vector<4x8x32xf32>
    "tpu.trace_stop"() : () -> ()
    %81 = arith.addf %58, %80 : vector<4x8x32xf32>
    %c3 = arith.constant 3 : index
    %c0_25 = arith.constant 0 : index
    %82 = vector.load %arg9[%c3, %c0_25] : memref<4x32xbf16, #tpu.memory_space<vmem>>, vector<1x32xbf16>
    %83 = vector.broadcast %82 : vector<1x32xbf16> to vector<32x32xbf16>
    %84 = arith.mulf %10, %83 : vector<32x32xbf16>
    %85 = vector.shape_cast %84 : vector<32x32xbf16> to vector<4x8x32xbf16>
    %86 = vector.broadcast %82 : vector<1x32xbf16> to vector<32x32xbf16>
    %87 = arith.mulf %11, %86 : vector<32x32xbf16>
    %88 = vector.shape_cast %87 : vector<32x32xbf16> to vector<4x8x32xbf16>
    "tpu.trace_start"() <{level = 10 : i32, message = "bqd,bkd->bqk"}> : () -> ()
    %cst_26 = arith.constant dense<0.000000e+00> : vector<4x8x8xf32>
    %89 = tpu.matmul %9, %85, %cst_26 {dimension_numbers = #tpu.dot_dimension_numbers<[2], [2], [1], [1], [0, 0, 0, 1, 1, 1], [0], [0]>} : vector<4x8x32xbf16>, vector<4x8x32xbf16>, vector<4x8x8xf32> -> vector<4x8x8xf32>
    "tpu.trace_stop"() : () -> ()
    %cst_27 = arith.constant 0.353553385 : f32
    %90 = vector.broadcast %cst_27 : f32 to vector<4x8x8xf32>
    %91 = arith.mulf %89, %90 : vector<4x8x8xf32>
    %cst_28 = arith.constant dense<0xFF800000> : vector<4x8xf32>
    %92 = vector.multi_reduction <maximumf>, %91, %cst_28 [2] : vector<4x8x8xf32> to vector<4x8xf32>
    %93 = vector.shape_cast %92 : vector<4x8xf32> to vector<4x8x1xf32>
    %94 = vector.broadcast %93 : vector<4x8x1xf32> to vector<4x8x8xf32>
    %95 = arith.subf %91, %94 : vector<4x8x8xf32>
    %96 = math.exp %95 : vector<4x8x8xf32>
    %cst_29 = arith.constant dense<0.000000e+00> : vector<4x8xf32>
    %97 = vector.multi_reduction <add>, %96, %cst_29 [2] : vector<4x8x8xf32> to vector<4x8xf32>
    %98 = vector.shape_cast %97 : vector<4x8xf32> to vector<4x8x1xf32>
    %99 = tpu.reciprocal %98 {approx = true} : vector<4x8x1xf32> -> vector<4x8x1xf32>
    %100 = vector.broadcast %99 : vector<4x8x1xf32> to vector<4x8x8xf32>
    %101 = arith.mulf %96, %100 : vector<4x8x8xf32>
    %102 = arith.truncf %101 : vector<4x8x8xf32> to vector<4x8x8xbf16>
    "tpu.trace_start"() <{level = 10 : i32, message = "bqk,bkd->bqd"}> : () -> ()
    %cst_30 = arith.constant dense<0.000000e+00> : vector<4x8x32xf32>
    %103 = tpu.matmul %102, %88, %cst_30 {dimension_numbers = #tpu.dot_dimension_numbers<[2], [1], [1], [2], [0, 0, 0, 1, 1, 2], [0], [0]>} : vector<4x8x8xbf16>, vector<4x8x32xbf16>, vector<4x8x32xf32> -> vector<4x8x32xf32>
    "tpu.trace_stop"() : () -> ()
    %104 = arith.addf %81, %103 : vector<4x8x32xf32>
    %105 = vector.shape_cast %104 : vector<4x8x32xf32> to vector<32x32xf32>
    %106 = arith.truncf %105 : vector<32x32xf32> to vector<32x32xbf16>
    %c0_31 = arith.constant 0 : index
    %c0_32 = arith.constant 0 : index
    %107 = vector.load %arg4[%c0_31, %c0_32] : memref<32x32xbf16, #tpu.memory_space<vmem>>, vector<32x32xbf16>
    %cst_33 = arith.constant dense<0.000000e+00> : vector<32x32xf32>
    %108 = tpu.matmul %106, %107, %cst_33 {dimension_numbers = #tpu.dot_dimension_numbers<[1], [0], [0], [1], [0, 0, 1, 1], [], []>} : vector<32x32xbf16>, vector<32x32xbf16>, vector<32x32xf32> -> vector<32x32xf32>
    %c0_34 = arith.constant 0 : index
    %c0_35 = arith.constant 0 : index
    %109 = vector.load %arg8[%c0_34, %c0_35] : memref<6x32xf32, #tpu.memory_space<vmem>>, vector<1x32xf32>
    %110 = vector.broadcast %109 : vector<1x32xf32> to vector<32x32xf32>
    %111 = arith.addf %108, %110 : vector<32x32xf32>
    %112 = arith.addf %111, %0 : vector<32x32xf32>
    %c1_36 = arith.constant 1 : index
    %c0_37 = arith.constant 0 : index
    %113 = vector.load %arg8[%c1_36, %c0_37] : memref<6x32xf32, #tpu.memory_space<vmem>>, vector<1x32xf32>
    %c2_38 = arith.constant 2 : index
    %c0_39 = arith.constant 0 : index
    %114 = vector.load %arg8[%c2_38, %c0_39] : memref<6x32xf32, #tpu.memory_space<vmem>>, vector<1x32xf32>
    %cst_40 = arith.constant dense<0.000000e+00> : vector<32xf32>
    %115 = vector.multi_reduction <add>, %112, %cst_40 [1] : vector<32x32xf32> to vector<32xf32>
    %116 = vector.shape_cast %115 : vector<32xf32> to vector<32x1xf32>
    %cst_41 = arith.constant 3.200000e+01 : f32
    %117 = vector.broadcast %cst_41 : f32 to vector<32x1xf32>
    %118 = arith.divf %116, %117 : vector<32x1xf32>
    %119 = vector.broadcast %118 : vector<32x1xf32> to vector<32x32xf32>
    %120 = arith.subf %112, %119 : vector<32x32xf32>
    %121 = arith.mulf %120, %120 : vector<32x32xf32>
    %cst_42 = arith.constant dense<0.000000e+00> : vector<32xf32>
    %122 = vector.multi_reduction <add>, %121, %cst_42 [1] : vector<32x32xf32> to vector<32xf32>
    %123 = vector.shape_cast %122 : vector<32xf32> to vector<32x1xf32>
    %cst_43 = arith.constant 3.200000e+01 : f32
    %124 = vector.broadcast %cst_43 : f32 to vector<32x1xf32>
    %125 = arith.divf %123, %124 : vector<32x1xf32>
    %126 = vector.broadcast %118 : vector<32x1xf32> to vector<32x32xf32>
    %127 = arith.subf %112, %126 : vector<32x32xf32>
    %cst_44 = arith.constant 9.99999974E-6 : f32
    %128 = vector.broadcast %cst_44 : f32 to vector<32x1xf32>
    %129 = arith.addf %125, %128 : vector<32x1xf32>
    %130 = math.rsqrt %129 : vector<32x1xf32>
    %131 = vector.broadcast %130 : vector<32x1xf32> to vector<32x32xf32>
    %132 = arith.mulf %127, %131 : vector<32x32xf32>
    %133 = vector.broadcast %113 : vector<1x32xf32> to vector<32x32xf32>
    %134 = arith.mulf %132, %133 : vector<32x32xf32>
    %135 = vector.broadcast %114 : vector<1x32xf32> to vector<32x32xf32>
    %136 = arith.addf %134, %135 : vector<32x32xf32>
    %137 = arith.truncf %136 : vector<32x32xf32> to vector<32x32xbf16>
    %c0_45 = arith.constant 0 : index
    %c0_46 = arith.constant 0 : index
    %138 = vector.load %arg5[%c0_45, %c0_46] : memref<32x64xbf16, #tpu.memory_space<vmem>>, vector<32x64xbf16>
    %cst_47 = arith.constant dense<0.000000e+00> : vector<32x64xf32>
    %139 = tpu.matmul %137, %138, %cst_47 {dimension_numbers = #tpu.dot_dimension_numbers<[1], [0], [0], [1], [0, 0, 1, 1], [], []>} : vector<32x32xbf16>, vector<32x64xbf16>, vector<32x64xf32> -> vector<32x64xf32>
    %c0_48 = arith.constant 0 : index
    %c0_49 = arith.constant 0 : index
    %140 = vector.load %arg6[%c0_48, %c0_49] : memref<1x64xf32, #tpu.memory_space<vmem>>, vector<1x64xf32>
    %141 = vector.broadcast %140 : vector<1x64xf32> to vector<32x64xf32>
    %142 = arith.addf %139, %141 : vector<32x64xf32>
    %cst_50 = arith.constant 0.000000e+00 : f32
    %143 = vector.broadcast %cst_50 : f32 to vector<32x64xf32>
    %144 = arith.maximumf %142, %143 : vector<32x64xf32>
    %145 = arith.truncf %144 : vector<32x64xf32> to vector<32x64xbf16>
    %c0_51 = arith.constant 0 : index
    %c0_52 = arith.constant 0 : index
    %146 = vector.load %arg7[%c0_51, %c0_52] : memref<64x32xbf16, #tpu.memory_space<vmem>>, vector<64x32xbf16>
    %cst_53 = arith.constant dense<0.000000e+00> : vector<32x32xf32>
    %147 = tpu.matmul %145, %146, %cst_53 {dimension_numbers = #tpu.dot_dimension_numbers<[1], [0], [0], [1], [0, 0, 1, 1], [], []>} : vector<32x64xbf16>, vector<64x32xbf16>, vector<32x32xf32> -> vector<32x32xf32>
    %c3_54 = arith.constant 3 : index
    %c0_55 = arith.constant 0 : index
    %148 = vector.load %arg8[%c3_54, %c0_55] : memref<6x32xf32, #tpu.memory_space<vmem>>, vector<1x32xf32>
    %149 = vector.broadcast %148 : vector<1x32xf32> to vector<32x32xf32>
    %150 = arith.addf %147, %149 : vector<32x32xf32>
    %151 = arith.addf %150, %136 : vector<32x32xf32>
    %c4 = arith.constant 4 : index
    %c0_56 = arith.constant 0 : index
    %152 = vector.load %arg8[%c4, %c0_56] : memref<6x32xf32, #tpu.memory_space<vmem>>, vector<1x32xf32>
    %c5 = arith.constant 5 : index
    %c0_57 = arith.constant 0 : index
    %153 = vector.load %arg8[%c5, %c0_57] : memref<6x32xf32, #tpu.memory_space<vmem>>, vector<1x32xf32>
    %cst_58 = arith.constant dense<0.000000e+00> : vector<32xf32>
    %154 = vector.multi_reduction <add>, %151, %cst_58 [1] : vector<32x32xf32> to vector<32xf32>
    %155 = vector.shape_cast %154 : vector<32xf32> to vector<32x1xf32>
    %cst_59 = arith.constant 3.200000e+01 : f32
    %156 = vector.broadcast %cst_59 : f32 to vector<32x1xf32>
    %157 = arith.divf %155, %156 : vector<32x1xf32>
    %158 = vector.broadcast %157 : vector<32x1xf32> to vector<32x32xf32>
    %159 = arith.subf %151, %158 : vector<32x32xf32>
    %160 = arith.mulf %159, %159 : vector<32x32xf32>
    %cst_60 = arith.constant dense<0.000000e+00> : vector<32xf32>
    %161 = vector.multi_reduction <add>, %160, %cst_60 [1] : vector<32x32xf32> to vector<32xf32>
    %162 = vector.shape_cast %161 : vector<32xf32> to vector<32x1xf32>
    %cst_61 = arith.constant 3.200000e+01 : f32
    %163 = vector.broadcast %cst_61 : f32 to vector<32x1xf32>
    %164 = arith.divf %162, %163 : vector<32x1xf32>
    %165 = vector.broadcast %157 : vector<32x1xf32> to vector<32x32xf32>
    %166 = arith.subf %151, %165 : vector<32x32xf32>
    %cst_62 = arith.constant 9.99999974E-6 : f32
    %167 = vector.broadcast %cst_62 : f32 to vector<32x1xf32>
    %168 = arith.addf %164, %167 : vector<32x1xf32>
    %169 = math.rsqrt %168 : vector<32x1xf32>
    %170 = vector.broadcast %169 : vector<32x1xf32> to vector<32x32xf32>
    %171 = arith.mulf %166, %170 : vector<32x32xf32>
    %172 = vector.broadcast %152 : vector<1x32xf32> to vector<32x32xf32>
    %173 = arith.mulf %171, %172 : vector<32x32xf32>
    %174 = vector.broadcast %153 : vector<1x32xf32> to vector<32x32xf32>
    %175 = arith.addf %173, %174 : vector<32x32xf32>
    %c0_63 = arith.constant 0 : index
    %c0_64 = arith.constant 0 : index
    %176 = vector.load %arg10[%c0_63, %c0_64] : memref<32x32xf32, #tpu.memory_space<vmem>>, vector<32x32xf32>
    tpu.vector_store %arg10[%c0_63, %c0_64], %175 {strides = array<i32>} : memref<32x32xf32, #tpu.memory_space<vmem>>, vector<32x32xf32>,
    return
  }
  func.func @transform_0(%arg0: i32) -> (i32, i32) {
    %c0_i32 = arith.constant 0 : i32
    %c0_i32_0 = arith.constant 0 : i32
    return %arg0, %c0_i32 : i32, i32
  }
  func.func @transform_1(%arg0: i32) -> (i32, i32) {
    %c0_i32 = arith.constant 0 : i32
    %c0_i32_0 = arith.constant 0 : i32
    %c0_i32_1 = arith.constant 0 : i32
    return %c0_i32, %c0_i32_0 : i32, i32
  }
  func.func @transform_2(%arg0: i32) -> (i32, i32) {
    %c0_i32 = arith.constant 0 : i32
    %c0_i32_0 = arith.constant 0 : i32
    %c0_i32_1 = arith.constant 0 : i32
    return %c0_i32, %c0_i32_0 : i32, i32
  }
  func.func @transform_3(%arg0: i32) -> (i32, i32) {
    %c0_i32 = arith.constant 0 : i32
    %c0_i32_0 = arith.constant 0 : i32
    %c0_i32_1 = arith.constant 0 : i32
    return %c0_i32, %c0_i32_0 : i32, i32
  }
  func.func @transform_4(%arg0: i32) -> (i32, i32) {
    %c0_i32 = arith.constant 0 : i32
    %c0_i32_0 = arith.constant 0 : i32
    %c0_i32_1 = arith.constant 0 : i32
    return %c0_i32, %c0_i32_0 : i32, i32
  }
  func.func @transform_5(%arg0: i32) -> (i32, i32) {
    %c0_i32 = arith.constant 0 : i32
    %c0_i32_0 = arith.constant 0 : i32
    %c0_i32_1 = arith.constant 0 : i32
    return %c0_i32, %c0_i32_0 : i32, i32
  }
  func.func @transform_6(%arg0: i32) -> (i32, i32) {
    %c0_i32 = arith.constant 0 : i32
    %c0_i32_0 = arith.constant 0 : i32
    %c0_i32_1 = arith.constant 0 : i32
    return %c0_i32, %c0_i32_0 : i32, i32
  }
  func.func @transform_7(%arg0: i32) -> (i32, i32) {
    %c0_i32 = arith.constant 0 : i32
    %c0_i32_0 = arith.constant 0 : i32
    %c0_i32_1 = arith.constant 0 : i32
    return %c0_i32, %c0_i32_0 : i32, i32
  }
  func.func @transform_8(%arg0: i32) -> (i32, i32) {
    %c0_i32 = arith.constant 0 : i32
    %c0_i32_0 = arith.constant 0 : i32
    %c0_i32_1 = arith.constant 0 : i32
    return %c0_i32, %c0_i32_0 : i32, i32
  }
  func.func @transform_9(%arg0: i32) -> (i32, i32) {
    %c0_i32 = arith.constant 0 : i32
    %c0_i32_0 = arith.constant 0 : i32
    return %arg0, %c0_i32 : i32, i32
  }
}

</mosaic_0001>

<llo_original>
// kernel: tpu_custom_call.1
$region0: #{tpu_custom_call.1}
  #allocation0 [shape = 'u32[]', space=smem, size = 0x4, offset = 0x4, fixed_abs, tag = 'smem constant byte address 0x4 - core index']
  #allocation1 [shape = 'u32[144,128]{1,0:T(1,128)}', space=vmem, size = 0x12000, scoped, tag = 'internal scratch']
  %s0 = inlined_call_operand.vmem [shape: f32[32,32], index: 0, kind: input, shape index: {}]
  %s1 = inlined_call_operand.vmem [shape: bf16[32,96], index: 1, kind: input, shape index: {}]
  %s2 = inlined_call_operand.hbm [shape: f32[1,96], index: 2, kind: input, shape index: {}]
  %s3 = inlined_call_operand.hbm [shape: bf16[32,32], index: 3, kind: input, shape index: {}]
  %s4 = inlined_call_operand.hbm [shape: bf16[32,64], index: 4, kind: input, shape index: {}]
  %s5 = inlined_call_operand.hbm [shape: f32[1,64], index: 5, kind: input, shape index: {}]
  %s6 = inlined_call_operand.vmem [shape: bf16[64,32], index: 6, kind: input, shape index: {}]
  %s7 = inlined_call_operand.vmem [shape: f32[6,32], index: 7, kind: input, shape index: {}]
  %s8 = inlined_call_operand.vmem [shape: bf16[4,32], index: 8, kind: input, shape index: {}]
  %s9 = inlined_call_operand.hbm [shape: f32[32,32], index: 9, kind: output, shape index: {}]
  %s10 = sld [smem:[#allocation0]]
  $region62: #{tpu_custom_call.1} parent=0
    _
  %s12 = ssub.s32 1, %s10
  %s13 = scalar_select 0, %s12, %s10
  $region1: #{tpu_custom_call.1} parent=0
    #allocation2 [shape = 'u8[512]{0}', space=vmem, size = 0x400, scoped, tag = 'input window, operand 2, single buffered']
    #allocation3 [shape = 's32[1]{0}', space=sflag, size = 0x4, scoped, tag = 'scoped memory for tpu_custom_call.1']
    #allocation4 [shape = 's32[1]{0}', space=sflag, size = 0x4, scoped, tag = 'scoped memory for tpu_custom_call.1']
    #allocation5 [shape = 'u8[8192]{0}', space=vmem, size = 0x2000, scoped, tag = 'input window, operand 3, single buffered']
    #allocation6 [shape = 's32[1]{0}', space=sflag, size = 0x4, scoped, tag = 'scoped memory for tpu_custom_call.1']
    #allocation7 [shape = 'u8[8192]{0}', space=vmem, size = 0x2000, scoped, tag = 'input window, operand 4, single buffered']
    #allocation8 [shape = 'u8[512]{0}', space=vmem, size = 0x400, scoped, tag = 'input window, operand 5, single buffered']
    #allocation9 [shape = 's32[1]{0}', space=sflag, size = 0x4, scoped, tag = 'scoped memory for tpu_custom_call.1']
    #allocation10 [shape = 'u8[16384]{0}', space=vmem, size = 0x4000, scoped, tag = 'output window, operand 0, single buffered']
    %14 = vsyncpa [#allocation3], 0
    %15 = vsyncpa [#allocation6], 0
    %16 = vsyncpa [#allocation9], 0
    %17 = vsyncpa [#allocation4], 0
    // Predicated region
    $region2: #{tpu_custom_call.1} parent=1 // pred_check
      _
    $region3: #{tpu_custom_call.1} parent=1 // pred_check_branch
      %19 = sbr.rel (0) target = $region5
    $region4: #{tpu_custom_call.1} parent=1 // pred_region
      _
    $region5: #{tpu_custom_call.1} parent=1 // pred_fallthru
      _
    // Predicated region
    $region6: #{tpu_custom_call.1} parent=1 // pred_check
      _
    $region7: #{tpu_custom_call.1} parent=1 // pred_check_branch
      %21 = sbr.rel (0) target = $region9
    $region8: #{tpu_custom_call.1} parent=1 // pred_region
      _
    $region9: #{tpu_custom_call.1} parent=1 // pred_fallthru
      _
    // Predicated region
    $region10: #{tpu_custom_call.1} parent=1 // pred_check
      _
    $region11: #{tpu_custom_call.1} parent=1 // pred_check_branch
      %23 = sbr.rel (0) target = $region13
    $region12: #{tpu_custom_call.1} parent=1 // pred_region
      %s25 = ssub.s32 16, 16
      %26 = vsyncadd [#allocation3], %s25
      %s28 = sshll.u32 [#allocation2], 4
      %s29 = int_to_ptr.vmem [resolvable:$true] %s28
      %31 = dma.hbm_to_vmem [thread:$0]  %s2, 16, %s29, [#allocation3]
    $region13: #{tpu_custom_call.1} parent=1 // pred_fallthru
      _
    // Predicated region
    $region14: #{tpu_custom_call.1} parent=1 // pred_check
      _
    $region15: #{tpu_custom_call.1} parent=1 // pred_check_branch
      %33 = sbr.rel (0) target = $region17
    $region16: #{tpu_custom_call.1} parent=1 // pred_region
      %s35 = ssub.s32 256, 256
      %36 = vsyncadd [#allocation6], %s35
      %s37 = sshll.u32 [#allocation5], 4
      %s38 = int_to_ptr.vmem [resolvable:$true] %s37
      %43 = dma.hbm_to_vmem [thread:$0]  %s3, 256, %s38, [#allocation6], 64, 64, 4
    $region17: #{tpu_custom_call.1} parent=1 // pred_fallthru
      _
    // Predicated region
    $region18: #{tpu_custom_call.1} parent=1 // pred_check
      _
    $region19: #{tpu_custom_call.1} parent=1 // pred_check_branch
      %45 = sbr.rel (0) target = $region21
    $region20: #{tpu_custom_call.1} parent=1 // pred_region
      %s47 = ssub.s32 256, 256
      %48 = vsyncadd [#allocation6], %s47
      %s49 = sshll.u32 [#allocation7], 4
      %s50 = int_to_ptr.vmem [resolvable:$true] %s49
      %55 = dma.hbm_to_vmem [thread:$0]  %s4, 256, %s50, [#allocation6], 64, 64, 4
    $region21: #{tpu_custom_call.1} parent=1 // pred_fallthru
      _
    // Predicated region
    $region22: #{tpu_custom_call.1} parent=1 // pred_check
      _
    $region23: #{tpu_custom_call.1} parent=1 // pred_check_branch
      %57 = sbr.rel (0) target = $region25
    $region24: #{tpu_custom_call.1} parent=1 // pred_region
      %s59 = ssub.s32 16, 16
      %60 = vsyncadd [#allocation9], %s59
      %s62 = sshll.u32 [#allocation8], 4
      %s63 = int_to_ptr.vmem [resolvable:$true] %s62
      %65 = dma.hbm_to_vmem [thread:$0]  %s5, 16, %s63, [#allocation9]
    $region25: #{tpu_custom_call.1} parent=1 // pred_fallthru
      _
    // Predicated region
    $region26: #{tpu_custom_call.1} parent=1 // pred_check
      _
    $region27: #{tpu_custom_call.1} parent=1 // pred_check_branch
      %67 = sbr.rel (0) target = $region29
    $region28: #{tpu_custom_call.1} parent=1 // pred_region
      _
    $region29: #{tpu_custom_call.1} parent=1 // pred_fallthru
      _
    // Predicated region
    $region30: #{tpu_custom_call.1} parent=1 // pred_check
      _
    $region31: #{tpu_custom_call.1} parent=1 // pred_check_branch
      %69 = sbr.rel (0) target = $region33
    $region32: #{tpu_custom_call.1} parent=1 // pred_region
      _
    $region33: #{tpu_custom_call.1} parent=1 // pred_fallthru
      _
    // Predicated region
    $region34: #{tpu_custom_call.1} parent=1 // pred_check
      _
    $region35: #{tpu_custom_call.1} parent=1 // pred_check_branch
      %71 = sbr.rel (0) target = $region37
    $region36: #{tpu_custom_call.1} parent=1 // pred_region
      _
    $region37: #{tpu_custom_call.1} parent=1 // pred_fallthru
      _
    // Predicated region
    $region38: #{tpu_custom_call.1} parent=1 // pred_check
      _
    $region39: #{tpu_custom_call.1} parent=1 // pred_check_branch
      %73 = sbr.rel (0) target = $region41
    $region40: #{tpu_custom_call.1} parent=1 // pred_region
      %74 = dma.done [#allocation3], 16
    $region41: #{tpu_custom_call.1} parent=1 // pred_fallthru
      _
    // Predicated region
    $region42: #{tpu_custom_call.1} parent=1 // pred_check
      _
    $region43: #{tpu_custom_call.1} parent=1 // pred_check_branch
      %76 = sbr.rel (0) target = $region45
    $region44: #{tpu_custom_call.1} parent=1 // pred_region
      %77 = dma.done [#allocation6], 256
    $region45: #{tpu_custom_call.1} parent=1 // pred_fallthru
      _
    // Predicated region
    $region46: #{tpu_custom_call.1} parent=1 // pred_check
      _
    $region47: #{tpu_custom_call.1} parent=1 // pred_check_branch
      %79 = sbr.rel (0) target = $region49
    $region48: #{tpu_custom_call.1} parent=1 // pred_region
      %80 = dma.done [#allocation6], 256
    $region49: #{tpu_custom_call.1} parent=1 // pred_fallthru
      _
    // Predicated region
    $region50: #{tpu_custom_call.1} parent=1 // pred_check
      _
    $region51: #{tpu_custom_call.1} parent=1 // pred_check_branch
      %82 = sbr.rel (0) target = $region53
    $region52: #{tpu_custom_call.1} parent=1 // pred_region
      %83 = dma.done [#allocation9], 16
    $region53: #{tpu_custom_call.1} parent=1 // pred_fallthru
      _
    %v85 = vld [vmem:[%s0] sm:$0xff]
    %v86 = vld [vmem:[%s0 + $0x8] sm:$0xff]
    %v87 = vld [vmem:[%s0 + $0x10] sm:$0xff]
    %v88 = vld [vmem:[%s0 + $0x18] sm:$0xff]
    %v89 = vpack.c.bf16 %v86, %v85
    %v90 = vpack.c.bf16 %v88, %v87
    %v91 = vld [vmem:[%s1] sm:$0xf]
    %v92 = vld [vmem:[%s1 + $0x4] sm:$0xf]
    %v93 = vld [vmem:[%s1 + $0x8] sm:$0xf]
    %v94 = vld [vmem:[%s1 + $0xc] sm:$0xf]
    %v95 = vld [vmem:[#allocation2] sm:$0x1]
    %v97 = vlaneseq
    %v98 = vshrl.u32 %v97, 7
    %v99 = vsub.s32 0, %v98
    %v100 = vrot.slane %v95, %v99
    %v106 = vunpack.c.l.b16 %v91
    %v107 = vunpack.c.l.b16 %v92
    %v108 = vunpack.c.l.b16 %v93
    %v109 = vunpack.c.l.b16 %v94
    %v110 = vpack.c.b16 %v107, %v106
    %v111 = vpack.c.b16 %v109, %v108
    %vm114 = vcmask 261120
    %v116 = vsel %vm114, %v89, 0
    %v119 = vsel %vm114, %v90, 0
    %121 = vmatprep.subr.bf16.mxu0 0
    %122 = vmatpush1.bf16.msra.mxu0 %v110
    %123 = vmatprep.subr.bf16.mxu0 0
    %124 = vmatpush1.bf16.msra.mxu0 %v111
    %125 = vmatprep.subr.bf16.mxu0 0
    %126 = vmatpush1.bf16.msra.mxu0 0
    %127 = vmatprep.subr.bf16.mxu0 0
    %128 = vmatpush1.bf16.msra.mxu0 0
    %129 = vmatprep.subr.bf16.mxu0 0
    %130 = vmatpush1.bf16.msra.mxu0 0
    %131 = vmatprep.subr.bf16.mxu0 0
    %132 = vmatpush1.bf16.msra.mxu0 0
    %133 = vmatprep.subr.bf16.mxu0 0
    %134 = vmatpush1.bf16.msra.mxu0 0
    %135 = vmatprep.subr.bf16.mxu0 0
    %136 = vmatpush1.bf16.msra.mxu0 0
    %137 = vmatprep.subr.bf16.mxu0 0
    %138 = vmatpush1.bf16.msra.mxu0 0
    %139 = vmatprep.subr.bf16.mxu0 0
    %140 = vmatpush1.bf16.msra.mxu0 0
    %141 = vmatprep.subr.bf16.mxu0 0
    %142 = vmatpush1.bf16.msra.mxu0 0
    %143 = vmatprep.subr.bf16.mxu0 0
    %144 = vmatpush1.bf16.msra.mxu0 0
    %145 = vmatprep.subr.bf16.mxu0 0
    %146 = vmatpush1.bf16.msra.mxu0 0
    %147 = vmatprep.subr.bf16.mxu0 0
    %148 = vmatpush1.bf16.msra.mxu0 0
    %149 = vmatprep.subr.bf16.mxu0 0
    %150 = vmatpush1.bf16.msra.mxu0 0
    %151 = vmatprep.subr.bf16.mxu0 0
    %152 = vmatpush1.bf16.msra.mxu0 0
    %153 = vmatprep.mubr.bf16.mxu0 0
    %154 = vmatmul.mubr.bf16.gmra.mrb[0].mxu0 %v116
    %v155 = vpop.f32.mrb[0].mxu0
    %v156 = vadd.f32 %v100, %v155
    %v157 = vpop.f32.mrb[0].mxu0
    %v158 = vpop.f32.mrb[0].mxu0
    %v159 = vadd.f32 %v100, %v158
    %v160 = vpop.f32.mrb[0].mxu0
    %161 = vmatprep.mubr.bf16.mxu0 0
    %162 = vmatmul.mubr.bf16.gmra.mrb[0].mxu0 %v119
    %v163 = vpop.f32.mrb[0].mxu0
    %v164 = vadd.f32 %v100, %v163
    %v165 = vpop.f32.mrb[0].mxu0
    %v166 = vpop.f32.mrb[0].mxu0
    %v167 = vadd.f32 %v100, %v166
    %v168 = vpop.f32.mrb[0].mxu0
    %169 = vdwg.mxu0
    %v170 = vpack.c.bf16 %v159, %v156
    %v171 = vpack.c.bf16 %v167, %v164
    %v174 = vunpack.c.l.b16 %v170
    %v175 = vunpack.c.h.b16 %v170
    %v176 = vunpack.c.l.b16 %v171
    %v177 = vunpack.c.h.b16 %v171
    %v178 = vpack.c.b16 %v174, %v174
    %v179 = vpack.c.b16 %v175, %v175
    %v180 = vpack.c.b16 %v176, %v176
    %v181 = vpack.c.b16 %v177, %v177
    %v182 = vld [vmem:[%s8] sm:$0x1]
    %v184 = vpack.i.b16 %v182, %v182
    %v186 = vlaneseq
    %v187 = vshrl.u32 %v186, 7
    %v188 = vsub.s32 0, %v187
    %v189 = vrot.slane %v184, %v188
    %191 = vrot.lane.b32.xlu0 %v189, 32
    %v192 = vpop.permute.xlu0 %191
    %v194 = vmul.bf16 %v170, %v192
    %v195 = vmul.bf16 %v171, %v192
    %v198 = vunpack.c.l.b16 %v194
    %v199 = vunpack.c.h.b16 %v194
    %v200 = vunpack.c.l.b16 %v195
    %v201 = vunpack.c.h.b16 %v195
    %202 = vrot.lane.b32.xlu0 %v189, 64
    %v203 = vpop.permute.xlu0 %202
    %v205 = vmul.bf16 %v170, %v203
    %v206 = vmul.bf16 %v171, %v203
    %v209 = vunpack.c.l.b16 %v205
    %v210 = vunpack.c.h.b16 %v205
    %v211 = vunpack.c.l.b16 %v206
    %v212 = vunpack.c.h.b16 %v206
    %v213 = vpack.c.b16 %v198, %v198
    %214 = vrot.lane.b32.xlu0 %v213, 96
    %v215 = vpop.permute.xlu0 %214
    %v217 = vsel %vm114, %v178, 0
    %v220 = vsel %vm114, %v215, 0
    %222 = vmatprep.subr.bf16.mxu0 0
    %223 = vmatpush1.bf16.xpose.msra.mxu0 %v220
    %224 = vmatprep.subr.bf16.mxu0 0
    %225 = vmatpush1.bf16.xpose.msra.mxu0 0
    %226 = vmatprep.subr.bf16.mxu0 0
    %227 = vmatpush1.bf16.xpose.msra.mxu0 0
    %228 = vmatprep.subr.bf16.mxu0 0
    %229 = vmatpush1.bf16.xpose.msra.mxu0 0
    %230 = vmatprep.subr.bf16.mxu0 0
    %231 = vmatpush1.bf16.xpose.msra.mxu0 0
    %232 = vmatprep.subr.bf16.mxu0 0
    %233 = vmatpush1.bf16.xpose.msra.mxu0 0
    %234 = vmatprep.subr.bf16.mxu0 0
    %235 = vmatpush1.bf16.xpose.msra.mxu0 0
    %236 = vmatprep.subr.bf16.mxu0 0
    %237 = vmatpush1.bf16.xpose.msra.mxu0 0
    %238 = vmatprep.subr.bf16.mxu0 0
    %239 = vmatpush1.bf16.xpose.msra.mxu0 0
    %240 = vmatprep.subr.bf16.mxu0 0
    %241 = vmatpush1.bf16.xpose.msra.mxu0 0
    %242 = vmatprep.subr.bf16.mxu0 0
    %243 = vmatpush1.bf16.xpose.msra.mxu0 0
    %244 = vmatprep.subr.bf16.mxu0 0
    %245 = vmatpush1.bf16.xpose.msra.mxu0 0
    %246 = vmatprep.subr.bf16.mxu0 0
    %247 = vmatpush1.bf16.xpose.msra.mxu0 0
    %248 = vmatprep.subr.bf16.mxu0 0
    %249 = vmatpush1.bf16.xpose.msra.mxu0 0
    %250 = vmatprep.subr.bf16.mxu0 0
    %251 = vmatpush1.bf16.xpose.msra.mxu0 0
    %252 = vmatprep.subr.bf16.mxu0 0
    %253 = vmatpush1.bf16.xpose.msra.mxu0 0
    %254 = vmatprep.mubr.bf16.mxu0 0
    %255 = vmatmul.mubr.bf16.gmra.mrb[0].mxu0 %v217
    %v256 = vpop.f32.mrb[0].mxu0
    %v257 = vadd.f32 0.0, %v256
    %v258 = vpop.f32.mrb[0].mxu0
    %v259 = vpop.f32.mrb[0].mxu0
    %v260 = vpop.f32.mrb[0].mxu0
    %261 = vdwg.mxu0
    %v262 = vpack.c.b16 %v199, %v199
    %263 = vrot.lane.b32.xlu0 %v262, 96
    %v264 = vpop.permute.xlu0 %263
    %v266 = vsel %vm114, %v179, 0
    %v269 = vsel %vm114, %v264, 0
    %271 = vmatprep.subr.bf16.mxu0 0
    %272 = vmatpush1.bf16.xpose.msra.mxu0 %v269
    %273 = vmatprep.subr.bf16.mxu0 0
    %274 = vmatpush1.bf16.xpose.msra.mxu0 0
    %275 = vmatprep.subr.bf16.mxu0 0
    %276 = vmatpush1.bf16.xpose.msra.mxu0 0
    %277 = vmatprep.subr.bf16.mxu0 0
    %278 = vmatpush1.bf16.xpose.msra.mxu0 0
    %279 = vmatprep.subr.bf16.mxu0 0
    %280 = vmatpush1.bf16.xpose.msra.mxu0 0
    %281 = vmatprep.subr.bf16.mxu0 0
    %282 = vmatpush1.bf16.xpose.msra.mxu0 0
    %283 = vmatprep.subr.bf16.mxu0 0
    %284 = vmatpush1.bf16.xpose.msra.mxu0 0
    %285 = vmatprep.subr.bf16.mxu0 0
    %286 = vmatpush1.bf16.xpose.msra.mxu0 0
    %287 = vmatprep.subr.bf16.mxu0 0
    %288 = vmatpush1.bf16.xpose.msra.mxu0 0
    %289 = vmatprep.subr.bf16.mxu0 0
    %290 = vmatpush1.bf16.xpose.msra.mxu0 0
    %291 = vmatprep.subr.bf16.mxu0 0
    %292 = vmatpush1.bf16.xpose.msra.mxu0 0
    %293 = vmatprep.subr.bf16.mxu0 0
    %294 = vmatpush1.bf16.xpose.msra.mxu0 0
    %295 = vmatprep.subr.bf16.mxu0 0
    %296 = vmatpush1.bf16.xpose.msra.mxu0 0
    %297 = vmatprep.subr.bf16.mxu0 0
    %298 = vmatpush1.bf16.xpose.msra.mxu0 0
    %299 = vmatprep.subr.bf16.mxu0 0
    %300 = vmatpush1.bf16.xpose.msra.mxu0 0
    %301 = vmatprep.subr.bf16.mxu0 0
    %302 = vmatpush1.bf16.xpose.msra.mxu0 0
    %303 = vmatprep.mubr.bf16.mxu0 0
    %304 = vmatmul.mubr.bf16.gmra.mrb[0].mxu0 %v266
    %v305 = vpop.f32.mrb[0].mxu0
    %v306 = vadd.f32 0.0, %v305
    %v307 = vpop.f32.mrb[0].mxu0
    %v308 = vpop.f32.mrb[0].mxu0
    %v309 = vpop.f32.mrb[0].mxu0
    %310 = vdwg.mxu0
    %v311 = vpack.c.b16 %v200, %v200
    %312 = vrot.lane.b32.xlu0 %v311, 96
    %v313 = vpop.permute.xlu0 %312
    %v315 = vsel %vm114, %v180, 0
    %v318 = vsel %vm114, %v313, 0
    %320 = vmatprep.subr.bf16.mxu0 0
    %321 = vmatpush1.bf16.xpose.msra.mxu0 %v318
    %322 = vmatprep.subr.bf16.mxu0 0
    %323 = vmatpush1.bf16.xpose.msra.mxu0 0
    %324 = vmatprep.subr.bf16.mxu0 0
    %325 = vmatpush1.bf16.xpose.msra.mxu0 0
    %326 = vmatprep.subr.bf16.mxu0 0
    %327 = vmatpush1.bf16.xpose.msra.mxu0 0
    %328 = vmatprep.subr.bf16.mxu0 0
    %329 = vmatpush1.bf16.xpose.msra.mxu0 0
    %330 = vmatprep.subr.bf16.mxu0 0
    %331 = vmatpush1.bf16.xpose.msra.mxu0 0
    %332 = vmatprep.subr.bf16.mxu0 0
    %333 = vmatpush1.bf16.xpose.msra.mxu0 0
    %334 = vmatprep.subr.bf16.mxu0 0
    %335 = vmatpush1.bf16.xpose.msra.mxu0 0
    %336 = vmatprep.subr.bf16.mxu0 0
    %337 = vmatpush1.bf16.xpose.msra.mxu0 0
    %338 = vmatprep.subr.bf16.mxu0 0
    %339 = vmatpush1.bf16.xpose.msra.mxu0 0
    %340 = vmatprep.subr.bf16.mxu0 0
    %341 = vmatpush1.bf16.xpose.msra.mxu0 0
    %342 = vmatprep.subr.bf16.mxu0 0
    %343 = vmatpush1.bf16.xpose.msra.mxu0 0
    %344 = vmatprep.subr.bf16.mxu0 0
    %345 = vmatpush1.bf16.xpose.msra.mxu0 0
    %346 = vmatprep.subr.bf16.mxu0 0
    %347 = vmatpush1.bf16.xpose.msra.mxu0 0
    %348 = vmatprep.subr.bf16.mxu0 0
    %349 = vmatpush1.bf16.xpose.msra.mxu0 0
    %350 = vmatprep.subr.bf16.mxu0 0
    %351 = vmatpush1.bf16.xpose.msra.mxu0 0
    %352 = vmatprep.mubr.bf16.mxu0 0
    %353 = vmatmul.mubr.bf16.gmra.mrb[0].mxu0 %v315
    %v354 = vpop.f32.mrb[0].mxu0
    %v355 = vadd.f32 0.0, %v354
    %v356 = vpop.f32.mrb[0].mxu0
    %v357 = vpop.f32.mrb[0].mxu0
    %v358 = vpop.f32.mrb[0].mxu0
    %359 = vdwg.mxu0
    %v360 = vpack.c.b16 %v201, %v201
    %361 = vrot.lane.b32.xlu0 %v360, 96
    %v362 = vpop.permute.xlu0 %361
    %v364 = vsel %vm114, %v181, 0
    %v367 = vsel %vm114, %v362, 0
    %369 = vmatprep.subr.bf16.mxu0 0
    %370 = vmatpush1.bf16.xpose.msra.mxu0 %v367
    %371 = vmatprep.subr.bf16.mxu0 0
    %372 = vmatpush1.bf16.xpose.msra.mxu0 0
    %373 = vmatprep.subr.bf16.mxu0 0
    %374 = vmatpush1.bf16.xpose.msra.mxu0 0
    %375 = vmatprep.subr.bf16.mxu0 0
    %376 = vmatpush1.bf16.xpose.msra.mxu0 0
    %377 = vmatprep.subr.bf16.mxu0 0
    %378 = vmatpush1.bf16.xpose.msra.mxu0 0
    %379 = vmatprep.subr.bf16.mxu0 0
    %380 = vmatpush1.bf16.xpose.msra.mxu0 0
    %381 = vmatprep.subr.bf16.mxu0 0
    %382 = vmatpush1.bf16.xpose.msra.mxu0 0
    %383 = vmatprep.subr.bf16.mxu0 0
    %384 = vmatpush1.bf16.xpose.msra.mxu0 0
    %385 = vmatprep.subr.bf16.mxu0 0
    %386 = vmatpush1.bf16.xpose.msra.mxu0 0
    %387 = vmatprep.subr.bf16.mxu0 0
    %388 = vmatpush1.bf16.xpose.msra.mxu0 0
    %389 = vmatprep.subr.bf16.mxu0 0
    %390 = vmatpush1.bf16.xpose.msra.mxu0 0
    %391 = vmatprep.subr.bf16.mxu0 0
    %392 = vmatpush1.bf16.xpose.msra.mxu0 0
    %393 = vmatprep.subr.bf16.mxu0 0
    %394 = vmatpush1.bf16.xpose.msra.mxu0 0
    %395 = vmatprep.subr.bf16.mxu0 0
    %396 = vmatpush1.bf16.xpose.msra.mxu0 0
    %397 = vmatprep.subr.bf16.mxu0 0
    %398 = vmatpush1.bf16.xpose.msra.mxu0 0
    %399 = vmatprep.subr.bf16.mxu0 0
    %400 = vmatpush1.bf16.xpose.msra.mxu0 0
    %401 = vmatprep.mubr.bf16.mxu0 0
    %402 = vmatmul.mubr.bf16.gmra.mrb[0].mxu0 %v364
    %v403 = vpop.f32.mrb[0].mxu0
    %v404 = vadd.f32 0.0, %v403
    %v405 = vpop.f32.mrb[0].mxu0
    %v406 = vpop.f32.mrb[0].mxu0
    %v407 = vpop.f32.mrb[0].mxu0
    %408 = vdwg.mxu0
    %v409 = vmul.f32 %v257, 0.35355338
    %v410 = vmul.f32 %v306, 0.35355338
    %v411 = vmul.f32 %v355, 0.35355338
    %v412 = vmul.f32 %v404, 0.35355338
    %vm413 = vcmask 64512
    %v414 = vsel %vm413, %v409, -inf
    %415 = vmax.xlane.f32.xlu0 %v414
    %v416 = vpop.xlane.xlu0 %415
    %v417 = vsel %vm413, %v410, -inf
    %418 = vmax.xlane.f32.xlu0 %v417
    %v419 = vpop.xlane.xlu0 %418
    %v420 = vsel %vm413, %v411, -inf
    %421 = vmax.xlane.f32.xlu0 %v420
    %v422 = vpop.xlane.xlu0 %421
    %v423 = vsel %vm413, %v412, -inf
    %424 = vmax.xlane.f32.xlu0 %v423
    %v425 = vpop.xlane.xlu0 %424
    %v426 = vsub.f32 %v409, %v416
    %v427 = vsub.f32 %v410, %v419
    %v428 = vsub.f32 %v411, %v422
    %v429 = vsub.f32 %v412, %v425
    %v430 = vmul.f32 %v426, 1.442695
    %v431 = vpow.pop %v430
    %v432 = vmul.f32 %v427, 1.442695
    %v433 = vpow.pop %v432
    %v434 = vmul.f32 %v428, 1.442695
    %v435 = vpow.pop %v434
    %v436 = vmul.f32 %v429, 1.442695
    %v437 = vpow.pop %v436
    %v438 = vsel %vm413, %v431, 0.0
    %439 = vadd.xlane.f32.xlu0 %v438
    %v440 = vpop.xlane.xlu0 %439
    %v441 = vsel %vm413, %v433, 0.0
    %442 = vadd.xlane.f32.xlu0 %v441
    %v443 = vpop.xlane.xlu0 %442
    %v444 = vsel %vm413, %v435, 0.0
    %445 = vadd.xlane.f32.xlu0 %v444
    %v446 = vpop.xlane.xlu0 %445
    %v447 = vsel %vm413, %v437, 0.0
    %448 = vadd.xlane.f32.xlu0 %v447
    %v449 = vpop.xlane.xlu0 %448
    %v450 = vrcp.pop %v440
    %v451 = vrcp.pop %v443
    %v452 = vrcp.pop %v446
    %v453 = vrcp.pop %v449
    %v454 = vmul.f32 %v431, %v450
    %v455 = vmul.f32 %v433, %v451
    %v456 = vmul.f32 %v435, %v452
    %v457 = vmul.f32 %v437, %v453
    %v458 = vpack.c.bf16 %v454, %v454
    %v459 = vpack.c.bf16 %v455, %v455
    %v460 = vpack.c.bf16 %v456, %v456
    %v461 = vpack.c.bf16 %v457, %v457
    %v462 = vld [vmem:[%s8] sm:$0x1]
    %v464 = vshrl.u32 %v462, 16
    %v465 = vpack.i.b16 %v464, %v464
    %v467 = vlaneseq
    %v468 = vshrl.u32 %v467, 7
    %v469 = vsub.s32 0, %v468
    %v470 = vrot.slane %v465, %v469
    %472 = vrot.lane.b32.xlu0 %v470, 32
    %v473 = vpop.permute.xlu0 %472
    %v475 = vmul.bf16 %v170, %v473
    %v476 = vmul.bf16 %v171, %v473
    %v479 = vunpack.c.l.b16 %v475
    %v480 = vunpack.c.h.b16 %v475
    %v481 = vunpack.c.l.b16 %v476
    %v482 = vunpack.c.h.b16 %v476
    %483 = vrot.lane.b32.xlu0 %v470, 64
    %v484 = vpop.permute.xlu0 %483
    %v486 = vmul.bf16 %v170, %v484
    %v487 = vmul.bf16 %v171, %v484
    %v490 = vunpack.c.l.b16 %v486
    %v491 = vunpack.c.h.b16 %v486
    %v492 = vunpack.c.l.b16 %v487
    %v493 = vunpack.c.h.b16 %v487
    %v494 = vpack.c.b16 %v479, %v479
    %495 = vrot.lane.b32.xlu0 %v494, 96
    %v496 = vpop.permute.xlu0 %495
    %v498 = vsel %vm114, %v496, 0
    %500 = vmatprep.subr.bf16.mxu0 0
    %501 = vmatpush1.bf16.xpose.msra.mxu0 %v498
    %502 = vmatprep.subr.bf16.mxu0 0
    %503 = vmatpush1.bf16.xpose.msra.mxu0 0
    %504 = vmatprep.subr.bf16.mxu0 0
    %505 = vmatpush1.bf16.xpose.msra.mxu0 0
    %506 = vmatprep.subr.bf16.mxu0 0
    %507 = vmatpush1.bf16.xpose.msra.mxu0 0
    %508 = vmatprep.subr.bf16.mxu0 0
    %509 = vmatpush1.bf16.xpose.msra.mxu0 0
    %510 = vmatprep.subr.bf16.mxu0 0
    %511 = vmatpush1.bf16.xpose.msra.mxu0 0
    %512 = vmatprep.subr.bf16.mxu0 0
    %513 = vmatpush1.bf16.xpose.msra.mxu0 0
    %514 = vmatprep.subr.bf16.mxu0 0
    %515 = vmatpush1.bf16.xpose.msra.mxu0 0
    %516 = vmatprep.subr.bf16.mxu0 0
    %517 = vmatpush1.bf16.xpose.msra.mxu0 0
    %518 = vmatprep.subr.bf16.mxu0 0
    %519 = vmatpush1.bf16.xpose.msra.mxu0 0
    %520 = vmatprep.subr.bf16.mxu0 0
    %521 = vmatpush1.bf16.xpose.msra.mxu0 0
    %522 = vmatprep.subr.bf16.mxu0 0
    %523 = vmatpush1.bf16.xpose.msra.mxu0 0
    %524 = vmatprep.subr.bf16.mxu0 0
    %525 = vmatpush1.bf16.xpose.msra.mxu0 0
    %526 = vmatprep.subr.bf16.mxu0 0
    %527 = vmatpush1.bf16.xpose.msra.mxu0 0
    %528 = vmatprep.subr.bf16.mxu0 0
    %529 = vmatpush1.bf16.xpose.msra.mxu0 0
    %530 = vmatprep.subr.bf16.mxu0 0
    %531 = vmatpush1.bf16.xpose.msra.mxu0 0
    %532 = vmatprep.mubr.bf16.mxu0 0
    %533 = vmatmul.mubr.bf16.gmra.mrb[0].mxu0 %v217
    %v534 = vpop.f32.mrb[0].mxu0
    %v535 = vadd.f32 0.0, %v534
    %v536 = vpop.f32.mrb[0].mxu0
    %v537 = vpop.f32.mrb[0].mxu0
    %v538 = vpop.f32.mrb[0].mxu0
    %539 = vdwg.mxu0
    %v540 = vpack.c.b16 %v480, %v480
    %541 = vrot.lane.b32.xlu0 %v540, 96
    %v542 = vpop.permute.xlu0 %541
    %v544 = vsel %vm114, %v542, 0
    %546 = vmatprep.subr.bf16.mxu0 0
    %547 = vmatpush1.bf16.xpose.msra.mxu0 %v544
    %548 = vmatprep.subr.bf16.mxu0 0
    %549 = vmatpush1.bf16.xpose.msra.mxu0 0
    %550 = vmatprep.subr.bf16.mxu0 0
    %551 = vmatpush1.bf16.xpose.msra.mxu0 0
    %552 = vmatprep.subr.bf16.mxu0 0
    %553 = vmatpush1.bf16.xpose.msra.mxu0 0
    %554 = vmatprep.subr.bf16.mxu0 0
    %555 = vmatpush1.bf16.xpose.msra.mxu0 0
    %556 = vmatprep.subr.bf16.mxu0 0
    %557 = vmatpush1.bf16.xpose.msra.mxu0 0
    %558 = vmatprep.subr.bf16.mxu0 0
    %559 = vmatpush1.bf16.xpose.msra.mxu0 0
    %560 = vmatprep.subr.bf16.mxu0 0
    %561 = vmatpush1.bf16.xpose.msra.mxu0 0
    %562 = vmatprep.subr.bf16.mxu0 0
    %563 = vmatpush1.bf16.xpose.msra.mxu0 0
    %564 = vmatprep.subr.bf16.mxu0 0
    %565 = vmatpush1.bf16.xpose.msra.mxu0 0
    %566 = vmatprep.subr.bf16.mxu0 0
    %567 = vmatpush1.bf16.xpose.msra.mxu0 0
    %568 = vmatprep.subr.bf16.mxu0 0
    %569 = vmatpush1.bf16.xpose.msra.mxu0 0
    %570 = vmatprep.subr.bf16.mxu0 0
    %571 = vmatpush1.bf16.xpose.msra.mxu0 0
    %572 = vmatprep.subr.bf16.mxu0 0
    %573 = vmatpush1.bf16.xpose.msra.mxu0 0
    %574 = vmatprep.subr.bf16.mxu0 0
    %575 = vmatpush1.bf16.xpose.msra.mxu0 0
    %576 = vmatprep.subr.bf16.mxu0 0
    %577 = vmatpush1.bf16.xpose.msra.mxu0 0
    %578 = vmatprep.mubr.bf16.mxu0 0
    %579 = vmatmul.mubr.bf16.gmra.mrb[0].mxu0 %v266
    %v580 = vpop.f32.mrb[0].mxu0
    %v581 = vadd.f32 0.0, %v580
    %v582 = vpop.f32.mrb[0].mxu0
    %v583 = vpop.f32.mrb[0].mxu0
    %v584 = vpop.f32.mrb[0].mxu0
    %585 = vdwg.mxu0
    %v586 = vpack.c.b16 %v481, %v481
    %587 = vrot.lane.b32.xlu0 %v586, 96
    %v588 = vpop.permute.xlu0 %587
    %v590 = vsel %vm114, %v588, 0
    %592 = vmatprep.subr.bf16.mxu0 0
    %593 = vmatpush1.bf16.xpose.msra.mxu0 %v590
    %594 = vmatprep.subr.bf16.mxu0 0
    %595 = vmatpush1.bf16.xpose.msra.mxu0 0
    %596 = vmatprep.subr.bf16.mxu0 0
    %597 = vmatpush1.bf16.xpose.msra.mxu0 0
    %598 = vmatprep.subr.bf16.mxu0 0
    %599 = vmatpush1.bf16.xpose.msra.mxu0 0
    %600 = vmatprep.subr.bf16.mxu0 0
    %601 = vmatpush1.bf16.xpose.msra.mxu0 0
    %602 = vmatprep.subr.bf16.mxu0 0
    %603 = vmatpush1.bf16.xpose.msra.mxu0 0
    %604 = vmatprep.subr.bf16.mxu0 0
    %605 = vmatpush1.bf16.xpose.msra.mxu0 0
    %606 = vmatprep.subr.bf16.mxu0 0
    %607 = vmatpush1.bf16.xpose.msra.mxu0 0
    %608 = vmatprep.subr.bf16.mxu0 0
    %609 = vmatpush1.bf16.xpose.msra.mxu0 0
    %610 = vmatprep.subr.bf16.mxu0 0
    %611 = vmatpush1.bf16.xpose.msra.mxu0 0
    %612 = vmatprep.subr.bf16.mxu0 0
    %613 = vmatpush1.bf16.xpose.msra.mxu0 0
    %614 = vmatprep.subr.bf16.mxu0 0
    %615 = vmatpush1.bf16.xpose.msra.mxu0 0
    %616 = vmatprep.subr.bf16.mxu0 0
    %617 = vmatpush1.bf16.xpose.msra.mxu0 0
    %618 = vmatprep.subr.bf16.mxu0 0
    %619 = vmatpush1.bf16.xpose.msra.mxu0 0
    %620 = vmatprep.subr.bf16.mxu0 0
    %621 = vmatpush1.bf16.xpose.msra.mxu0 0
    %622 = vmatprep.subr.bf16.mxu0 0
    %623 = vmatpush1.bf16.xpose.msra.mxu0 0
    %624 = vmatprep.mubr.bf16.mxu0 0
    %625 = vmatmul.mubr.bf16.gmra.mrb[0].mxu0 %v315
    %v626 = vpop.f32.mrb[0].mxu0
    %v627 = vadd.f32 0.0, %v626
    %v628 = vpop.f32.mrb[0].mxu0
    %v629 = vpop.f32.mrb[0].mxu0
    %v630 = vpop.f32.mrb[0].mxu0
    %631 = vdwg.mxu0
    %v632 = vpack.c.b16 %v482, %v482
    %633 = vrot.lane.b32.xlu0 %v632, 96
    %v634 = vpop.permute.xlu0 %633
    %v636 = vsel %vm114, %v634, 0
    %638 = vmatprep.subr.bf16.mxu0 0
    %639 = vmatpush1.bf16.xpose.msra.mxu0 %v636
    %640 = vmatprep.subr.bf16.mxu0 0
    %641 = vmatpush1.bf16.xpose.msra.mxu0 0
    %642 = vmatprep.subr.bf16.mxu0 0
    %643 = vmatpush1.bf16.xpose.msra.mxu0 0
    %644 = vmatprep.subr.bf16.mxu0 0
    %645 = vmatpush1.bf16.xpose.msra.mxu0 0
    %646 = vmatprep.subr.bf16.mxu0 0
    %647 = vmatpush1.bf16.xpose.msra.mxu0 0
    %648 = vmatprep.subr.bf16.mxu0 0
    %649 = vmatpush1.bf16.xpose.msra.mxu0 0
    %650 = vmatprep.subr.bf16.mxu0 0
    %651 = vmatpush1.bf16.xpose.msra.mxu0 0
    %652 = vmatprep.subr.bf16.mxu0 0
    %653 = vmatpush1.bf16.xpose.msra.mxu0 0
    %654 = vmatprep.subr.bf16.mxu0 0
    %655 = vmatpush1.bf16.xpose.msra.mxu0 0
    %656 = vmatprep.subr.bf16.mxu0 0
    %657 = vmatpush1.bf16.xpose.msra.mxu0 0
    %658 = vmatprep.subr.bf16.mxu0 0
    %659 = vmatpush1.bf16.xpose.msra.mxu0 0
    %660 = vmatprep.subr.bf16.mxu0 0
    %661 = vmatpush1.bf16.xpose.msra.mxu0 0
    %662 = vmatprep.subr.bf16.mxu0 0
    %663 = vmatpush1.bf16.xpose.msra.mxu0 0
    %664 = vmatprep.subr.bf16.mxu0 0
    %665 = vmatpush1.bf16.xpose.msra.mxu0 0
    %666 = vmatprep.subr.bf16.mxu0 0
    %667 = vmatpush1.bf16.xpose.msra.mxu0 0
    %668 = vmatprep.subr.bf16.mxu0 0
    %669 = vmatpush1.bf16.xpose.msra.mxu0 0
    %670 = vmatprep.mubr.bf16.mxu0 0
    %671 = vmatmul.mubr.bf16.gmra.mrb[0].mxu0 %v364
    %v672 = vpop.f32.mrb[0].mxu0
    %v673 = vadd.f32 0.0, %v672
    %v674 = vpop.f32.mrb[0].mxu0
    %v675 = vpop.f32.mrb[0].mxu0
    %v676 = vpop.f32.mrb[0].mxu0
    %677 = vdwg.mxu0
    %v678 = vmul.f32 %v535, 0.35355338
    %v679 = vmul.f32 %v581, 0.35355338
    %v680 = vmul.f32 %v627, 0.35355338
    %v681 = vmul.f32 %v673, 0.35355338
    %v682 = vsel %vm413, %v678, -inf
    %683 = vmax.xlane.f32.xlu0 %v682
    %v684 = vpop.xlane.xlu0 %683
    %v685 = vsel %vm413, %v679, -inf
    %686 = vmax.xlane.f32.xlu0 %v685
    %v687 = vpop.xlane.xlu0 %686
    %v688 = vsel %vm413, %v680, -inf
    %689 = vmax.xlane.f32.xlu0 %v688
    %v690 = vpop.xlane.xlu0 %689
    %v691 = vsel %vm413, %v681, -inf
    %692 = vmax.xlane.f32.xlu0 %v691
    %v693 = vpop.xlane.xlu0 %692
    %v694 = vsub.f32 %v678, %v684
    %v695 = vsub.f32 %v679, %v687
    %v696 = vsub.f32 %v680, %v690
    %v697 = vsub.f32 %v681, %v693
    %v698 = vmul.f32 %v694, 1.442695
    %v699 = vpow.pop %v698
    %v700 = vmul.f32 %v695, 1.442695
    %v701 = vpow.pop %v700
    %v702 = vmul.f32 %v696, 1.442695
    %v703 = vpow.pop %v702
    %v704 = vmul.f32 %v697, 1.442695
    %v705 = vpow.pop %v704
    %v706 = vsel %vm413, %v699, 0.0
    %707 = vadd.xlane.f32.xlu0 %v706
    %v708 = vpop.xlane.xlu0 %707
    %v709 = vsel %vm413, %v701, 0.0
    %710 = vadd.xlane.f32.xlu0 %v709
    %v711 = vpop.xlane.xlu0 %710
    %v712 = vsel %vm413, %v703, 0.0
    %713 = vadd.xlane.f32.xlu0 %v712
    %v714 = vpop.xlane.xlu0 %713
    %v715 = vsel %vm413, %v705, 0.0
    %716 = vadd.xlane.f32.xlu0 %v715
    %v717 = vpop.xlane.xlu0 %716
    %v718 = vrcp.pop %v708
    %v719 = vrcp.pop %v711
    %v720 = vrcp.pop %v714
    %v721 = vrcp.pop %v717
    %v722 = vmul.f32 %v699, %v718
    %v723 = vmul.f32 %v701, %v719
    %v724 = vmul.f32 %v703, %v720
    %v725 = vmul.f32 %v705, %v721
    %v726 = vpack.c.bf16 %v722, %v722
    %v727 = vpack.c.bf16 %v723, %v723
    %v728 = vpack.c.bf16 %v724, %v724
    %v729 = vpack.c.bf16 %v725, %v725
    %v730 = vpack.c.b16 %v490, %v490
    %731 = vrot.lane.b32.xlu0 %v730, 64
    %v732 = vpop.permute.xlu0 %731
    %v734 = vsel %vm413, %v726, 0
    %vm736 = vcmask 1043456
    %v738 = vsel %vm736, %v732, 0
    %740 = vmatprep.subr.bf16.mxu0 0
    %741 = vmatpush1.bf16.msra.mxu0 %v738
    %742 = vmatprep.subr.bf16.mxu0 0
    %743 = vmatpush1.bf16.msra.mxu0 0
    %744 = vmatprep.subr.bf16.mxu0 0
    %745 = vmatpush1.bf16.msra.mxu0 0
    %746 = vmatprep.subr.bf16.mxu0 0
    %747 = vmatpush1.bf16.msra.mxu0 0
    %748 = vmatprep.subr.bf16.mxu0 0
    %749 = vmatpush1.bf16.msra.mxu0 0
    %750 = vmatprep.subr.bf16.mxu0 0
    %751 = vmatpush1.bf16.msra.mxu0 0
    %752 = vmatprep.subr.bf16.mxu0 0
    %753 = vmatpush1.bf16.msra.mxu0 0
    %754 = vmatprep.subr.bf16.mxu0 0
    %755 = vmatpush1.bf16.msra.mxu0 0
    %756 = vmatprep.subr.bf16.mxu0 0
    %757 = vmatpush1.bf16.msra.mxu0 0
    %758 = vmatprep.subr.bf16.mxu0 0
    %759 = vmatpush1.bf16.msra.mxu0 0
    %760 = vmatprep.subr.bf16.mxu0 0
    %761 = vmatpush1.bf16.msra.mxu0 0
    %762 = vmatprep.subr.bf16.mxu0 0
    %763 = vmatpush1.bf16.msra.mxu0 0
    %764 = vmatprep.subr.bf16.mxu0 0
    %765 = vmatpush1.bf16.msra.mxu0 0
    %766 = vmatprep.subr.bf16.mxu0 0
    %767 = vmatpush1.bf16.msra.mxu0 0
    %768 = vmatprep.subr.bf16.mxu0 0
    %769 = vmatpush1.bf16.msra.mxu0 0
    %770 = vmatprep.subr.bf16.mxu0 0
    %771 = vmatpush1.bf16.msra.mxu0 0
    %772 = vmatprep.mubr.bf16.mxu0 0
    %773 = vmatmul.mubr.bf16.gmra.mrb[0].mxu0 %v734
    %v774 = vpop.f32.mrb[0].mxu0
    %v775 = vadd.f32 0.0, %v774
    %v776 = vpop.f32.mrb[0].mxu0
    %v777 = vpop.f32.mrb[0].mxu0
    %v778 = vpop.f32.mrb[0].mxu0
    %779 = vdwg.mxu0
    %v780 = vpack.c.b16 %v491, %v491
    %781 = vrot.lane.b32.xlu0 %v780, 64
    %v782 = vpop.permute.xlu0 %781
    %v784 = vsel %vm413, %v727, 0
    %v787 = vsel %vm736, %v782, 0
    %789 = vmatprep.subr.bf16.mxu0 0
    %790 = vmatpush1.bf16.msra.mxu0 %v787
    %791 = vmatprep.subr.bf16.mxu0 0
    %792 = vmatpush1.bf16.msra.mxu0 0
    %793 = vmatprep.subr.bf16.mxu0 0
    %794 = vmatpush1.bf16.msra.mxu0 0
    %795 = vmatprep.subr.bf16.mxu0 0
    %796 = vmatpush1.bf16.msra.mxu0 0
    %797 = vmatprep.subr.bf16.mxu0 0
    %798 = vmatpush1.bf16.msra.mxu0 0
    %799 = vmatprep.subr.bf16.mxu0 0
    %800 = vmatpush1.bf16.msra.mxu0 0
    %801 = vmatprep.subr.bf16.mxu0 0
    %802 = vmatpush1.bf16.msra.mxu0 0
    %803 = vmatprep.subr.bf16.mxu0 0
    %804 = vmatpush1.bf16.msra.mxu0 0
    %805 = vmatprep.subr.bf16.mxu0 0
    %806 = vmatpush1.bf16.msra.mxu0 0
    %807 = vmatprep.subr.bf16.mxu0 0
    %808 = vmatpush1.bf16.msra.mxu0 0
    %809 = vmatprep.subr.bf16.mxu0 0
    %810 = vmatpush1.bf16.msra.mxu0 0
    %811 = vmatprep.subr.bf16.mxu0 0
    %812 = vmatpush1.bf16.msra.mxu0 0
    %813 = vmatprep.subr.bf16.mxu0 0
    %814 = vmatpush1.bf16.msra.mxu0 0
    %815 = vmatprep.subr.bf16.mxu0 0
    %816 = vmatpush1.bf16.msra.mxu0 0
    %817 = vmatprep.subr.bf16.mxu0 0
    %818 = vmatpush1.bf16.msra.mxu0 0
    %819 = vmatprep.subr.bf16.mxu0 0
    %820 = vmatpush1.bf16.msra.mxu0 0
    %821 = vmatprep.mubr.bf16.mxu0 0
    %822 = vmatmul.mubr.bf16.gmra.mrb[0].mxu0 %v784
    %v823 = vpop.f32.mrb[0].mxu0
    %v824 = vadd.f32 0.0, %v823
    %v825 = vpop.f32.mrb[0].mxu0
    %v826 = vpop.f32.mrb[0].mxu0
    %v827 = vpop.f32.mrb[0].mxu0
    %828 = vdwg.mxu0
    %v829 = vpack.c.b16 %v492, %v492
    %830 = vrot.lane.b32.xlu0 %v829, 64
    %v831 = vpop.permute.xlu0 %830
    %v833 = vsel %vm413, %v728, 0
    %v836 = vsel %vm736, %v831, 0
    %838 = vmatprep.subr.bf16.mxu0 0
    %839 = vmatpush1.bf16.msra.mxu0 %v836
    %840 = vmatprep.subr.bf16.mxu0 0
    %841 = vmatpush1.bf16.msra.mxu0 0
    %842 = vmatprep.subr.bf16.mxu0 0
    %843 = vmatpush1.bf16.msra.mxu0 0
    %844 = vmatprep.subr.bf16.mxu0 0
    %845 = vmatpush1.bf16.msra.mxu0 0
    %846 = vmatprep.subr.bf16.mxu0 0
    %847 = vmatpush1.bf16.msra.mxu0 0
    %848 = vmatprep.subr.bf16.mxu0 0
    %849 = vmatpush1.bf16.msra.mxu0 0
    %850 = vmatprep.subr.bf16.mxu0 0
    %851 = vmatpush1.bf16.msra.mxu0 0
    %852 = vmatprep.subr.bf16.mxu0 0
    %853 = vmatpush1.bf16.msra.mxu0 0
    %854 = vmatprep.subr.bf16.mxu0 0
    %855 = vmatpush1.bf16.msra.mxu0 0
    %856 = vmatprep.subr.bf16.mxu0 0
    %857 = vmatpush1.bf16.msra.mxu0 0
    %858 = vmatprep.subr.bf16.mxu0 0
    %859 = vmatpush1.bf16.msra.mxu0 0
    %860 = vmatprep.subr.bf16.mxu0 0
    %861 = vmatpush1.bf16.msra.mxu0 0
    %862 = vmatprep.subr.bf16.mxu0 0
    %863 = vmatpush1.bf16.msra.mxu0 0
    %864 = vmatprep.subr.bf16.mxu0 0
    %865 = vmatpush1.bf16.msra.mxu0 0
    %866 = vmatprep.subr.bf16.mxu0 0
    %867 = vmatpush1.bf16.msra.mxu0 0
    %868 = vmatprep.subr.bf16.mxu0 0
    %869 = vmatpush1.bf16.msra.mxu0 0
    %870 = vmatprep.mubr.bf16.mxu0 0
    %871 = vmatmul.mubr.bf16.gmra.mrb[0].mxu0 %v833
    %v872 = vpop.f32.mrb[0].mxu0
    %v873 = vadd.f32 0.0, %v872
    %v874 = vpop.f32.mrb[0].mxu0
    %v875 = vpop.f32.mrb[0].mxu0
    %v876 = vpop.f32.mrb[0].mxu0
    %877 = vdwg.mxu0
    %v878 = vpack.c.b16 %v493, %v493
    %879 = vrot.lane.b32.xlu0 %v878, 64
    %v880 = vpop.permute.xlu0 %879
    %v882 = vsel %vm413, %v729, 0
    %v885 = vsel %vm736, %v880, 0
    %887 = vmatprep.subr.bf16.mxu0 0
    %888 = vmatpush1.bf16.msra.mxu0 %v885
    %889 = vmatprep.subr.bf16.mxu0 0
    %890 = vmatpush1.bf16.msra.mxu0 0
    %891 = vmatprep.subr.bf16.mxu0 0
    %892 = vmatpush1.bf16.msra.mxu0 0
    %893 = vmatprep.subr.bf16.mxu0 0
    %894 = vmatpush1.bf16.msra.mxu0 0
    %895 = vmatprep.subr.bf16.mxu0 0
    %896 = vmatpush1.bf16.msra.mxu0 0
    %897 = vmatprep.subr.bf16.mxu0 0
    %898 = vmatpush1.bf16.msra.mxu0 0
    %899 = vmatprep.subr.bf16.mxu0 0
    %900 = vmatpush1.bf16.msra.mxu0 0
    %901 = vmatprep.subr.bf16.mxu0 0
    %902 = vmatpush1.bf16.msra.mxu0 0
    %903 = vmatprep.subr.bf16.mxu0 0
    %904 = vmatpush1.bf16.msra.mxu0 0
    %905 = vmatprep.subr.bf16.mxu0 0
    %906 = vmatpush1.bf16.msra.mxu0 0
    %907 = vmatprep.subr.bf16.mxu0 0
    %908 = vmatpush1.bf16.msra.mxu0 0
    %909 = vmatprep.subr.bf16.mxu0 0
    %910 = vmatpush1.bf16.msra.mxu0 0
    %911 = vmatprep.subr.bf16.mxu0 0
    %912 = vmatpush1.bf16.msra.mxu0 0
    %913 = vmatprep.subr.bf16.mxu0 0
    %914 = vmatpush1.bf16.msra.mxu0 0
    %915 = vmatprep.subr.bf16.mxu0 0
    %916 = vmatpush1.bf16.msra.mxu0 0
    %917 = vmatprep.subr.bf16.mxu0 0
    %918 = vmatpush1.bf16.msra.mxu0 0
    %919 = vmatprep.mubr.bf16.mxu0 0
    %920 = vmatmul.mubr.bf16.gmra.mrb[0].mxu0 %v882
    %v921 = vpop.f32.mrb[0].mxu0
    %v922 = vadd.f32 0.0, %v921
    %v923 = vpop.f32.mrb[0].mxu0
    %v924 = vpop.f32.mrb[0].mxu0
    %v925 = vpop.f32.mrb[0].mxu0
    %926 = vdwg.mxu0
    %v927 = vpack.c.b16 %v209, %v209
    %928 = vrot.lane.b32.xlu0 %v927, 64
    %v929 = vpop.permute.xlu0 %928
    %v931 = vsel %vm413, %v458, 0
    %v934 = vsel %vm736, %v929, 0
    %936 = vmatprep.subr.bf16.mxu0 0
    %937 = vmatpush1.bf16.msra.mxu0 %v934
    %938 = vmatprep.subr.bf16.mxu0 0
    %939 = vmatpush1.bf16.msra.mxu0 0
    %940 = vmatprep.subr.bf16.mxu0 0
    %941 = vmatpush1.bf16.msra.mxu0 0
    %942 = vmatprep.subr.bf16.mxu0 0
    %943 = vmatpush1.bf16.msra.mxu0 0
    %944 = vmatprep.subr.bf16.mxu0 0
    %945 = vmatpush1.bf16.msra.mxu0 0
    %946 = vmatprep.subr.bf16.mxu0 0
    %947 = vmatpush1.bf16.msra.mxu0 0
    %948 = vmatprep.subr.bf16.mxu0 0
    %949 = vmatpush1.bf16.msra.mxu0 0
    %950 = vmatprep.subr.bf16.mxu0 0
    %951 = vmatpush1.bf16.msra.mxu0 0
    %952 = vmatprep.subr.bf16.mxu0 0
    %953 = vmatpush1.bf16.msra.mxu0 0
    %954 = vmatprep.subr.bf16.mxu0 0
    %955 = vmatpush1.bf16.msra.mxu0 0
    %956 = vmatprep.subr.bf16.mxu0 0
    %957 = vmatpush1.bf16.msra.mxu0 0
    %958 = vmatprep.subr.bf16.mxu0 0
    %959 = vmatpush1.bf16.msra.mxu0 0
    %960 = vmatprep.subr.bf16.mxu0 0
    %961 = vmatpush1.bf16.msra.mxu0 0
    %962 = vmatprep.subr.bf16.mxu0 0
    %963 = vmatpush1.bf16.msra.mxu0 0
    %964 = vmatprep.subr.bf16.mxu0 0
    %965 = vmatpush1.bf16.msra.mxu0 0
    %966 = vmatprep.subr.bf16.mxu0 0
    %967 = vmatpush1.bf16.msra.mxu0 0
    %968 = vmatprep.mubr.bf16.mxu0 0
    %969 = vmatmul.mubr.bf16.gmra.mrb[0].mxu0 %v931
    %v970 = vpop.f32.mrb[0].mxu0
    %v971 = vadd.f32 %v775, %v970
    %v972 = vpop.f32.mrb[0].mxu0
    %v973 = vpop.f32.mrb[0].mxu0
    %v974 = vpop.f32.mrb[0].mxu0
    %975 = vdwg.mxu0
    %v976 = vpack.c.b16 %v210, %v210
    %977 = vrot.lane.b32.xlu0 %v976, 64
    %v978 = vpop.permute.xlu0 %977
    %v980 = vsel %vm413, %v459, 0
    %v983 = vsel %vm736, %v978, 0
    %985 = vmatprep.subr.bf16.mxu0 0
    %986 = vmatpush1.bf16.msra.mxu0 %v983
    %987 = vmatprep.subr.bf16.mxu0 0
    %988 = vmatpush1.bf16.msra.mxu0 0
    %989 = vmatprep.subr.bf16.mxu0 0
    %990 = vmatpush1.bf16.msra.mxu0 0
    %991 = vmatprep.subr.bf16.mxu0 0
    %992 = vmatpush1.bf16.msra.mxu0 0
    %993 = vmatprep.subr.bf16.mxu0 0
    %994 = vmatpush1.bf16.msra.mxu0 0
    %995 = vmatprep.subr.bf16.mxu0 0
    %996 = vmatpush1.bf16.msra.mxu0 0
    %997 = vmatprep.subr.bf16.mxu0 0
    %998 = vmatpush1.bf16.msra.mxu0 0
    %999 = vmatprep.subr.bf16.mxu0 0
    %1000 = vmatpush1.bf16.msra.mxu0 0
    %1001 = vmatprep.subr.bf16.mxu0 0
    %1002 = vmatpush1.bf16.msra.mxu0 0
    %1003 = vmatprep.subr.bf16.mxu0 0
    %1004 = vmatpush1.bf16.msra.mxu0 0
    %1005 = vmatprep.subr.bf16.mxu0 0
    %1006 = vmatpush1.bf16.msra.mxu0 0
    %1007 = vmatprep.subr.bf16.mxu0 0
    %1008 = vmatpush1.bf16.msra.mxu0 0
    %1009 = vmatprep.subr.bf16.mxu0 0
    %1010 = vmatpush1.bf16.msra.mxu0 0
    %1011 = vmatprep.subr.bf16.mxu0 0
    %1012 = vmatpush1.bf16.msra.mxu0 0
    %1013 = vmatprep.subr.bf16.mxu0 0
    %1014 = vmatpush1.bf16.msra.mxu0 0
    %1015 = vmatprep.subr.bf16.mxu0 0
    %1016 = vmatpush1.bf16.msra.mxu0 0
    %1017 = vmatprep.mubr.bf16.mxu0 0
    %1018 = vmatmul.mubr.bf16.gmra.mrb[0].mxu0 %v980
    %v1019 = vpop.f32.mrb[0].mxu0
    %v1020 = vadd.f32 %v824, %v1019
    %v1021 = vpop.f32.mrb[0].mxu0
    %v1022 = vpop.f32.mrb[0].mxu0
    %v1023 = vpop.f32.mrb[0].mxu0
    %1024 = vdwg.mxu0
    %v1025 = vpack.c.b16 %v211, %v211
    %1026 = vrot.lane.b32.xlu0 %v1025, 64
    %v1027 = vpop.permute.xlu0 %1026
    %v1029 = vsel %vm413, %v460, 0
    %v1032 = vsel %vm736, %v1027, 0
    %1034 = vmatprep.subr.bf16.mxu0 0
    %1035 = vmatpush1.bf16.msra.mxu0 %v1032
    %1036 = vmatprep.subr.bf16.mxu0 0
    %1037 = vmatpush1.bf16.msra.mxu0 0
    %1038 = vmatprep.subr.bf16.mxu0 0
    %1039 = vmatpush1.bf16.msra.mxu0 0
    %1040 = vmatprep.subr.bf16.mxu0 0
    %1041 = vmatpush1.bf16.msra.mxu0 0
    %1042 = vmatprep.subr.bf16.mxu0 0
    %1043 = vmatpush1.bf16.msra.mxu0 0
    %1044 = vmatprep.subr.bf16.mxu0 0
    %1045 = vmatpush1.bf16.msra.mxu0 0
    %1046 = vmatprep.subr.bf16.mxu0 0
    %1047 = vmatpush1.bf16.msra.mxu0 0
    %1048 = vmatprep.subr.bf16.mxu0 0
    %1049 = vmatpush1.bf16.msra.mxu0 0
    %1050 = vmatprep.subr.bf16.mxu0 0
    %1051 = vmatpush1.bf16.msra.mxu0 0
    %1052 = vmatprep.subr.bf16.mxu0 0
    %1053 = vmatpush1.bf16.msra.mxu0 0
    %1054 = vmatprep.subr.bf16.mxu0 0
    %1055 = vmatpush1.bf16.msra.mxu0 0
    %1056 = vmatprep.subr.bf16.mxu0 0
    %1057 = vmatpush1.bf16.msra.mxu0 0
    %1058 = vmatprep.subr.bf16.mxu0 0
    %1059 = vmatpush1.bf16.msra.mxu0 0
    %1060 = vmatprep.subr.bf16.mxu0 0
    %1061 = vmatpush1.bf16.msra.mxu0 0
    %1062 = vmatprep.subr.bf16.mxu0 0
    %1063 = vmatpush1.bf16.msra.mxu0 0
    %1064 = vmatprep.subr.bf16.mxu0 0
    %1065 = vmatpush1.bf16.msra.mxu0 0
    %1066 = vmatprep.mubr.bf16.mxu0 0
    %1067 = vmatmul.mubr.bf16.gmra.mrb[0].mxu0 %v1029
    %v1068 = vpop.f32.mrb[0].mxu0
    %v1069 = vadd.f32 %v873, %v1068
    %v1070 = vpop.f32.mrb[0].mxu0
    %v1071 = vpop.f32.mrb[0].mxu0
    %v1072 = vpop.f32.mrb[0].mxu0
    %1073 = vdwg.mxu0
    %v1074 = vpack.c.b16 %v212, %v212
    %1075 = vrot.lane.b32.xlu0 %v1074, 64
    %v1076 = vpop.permute.xlu0 %1075
    %v1078 = vsel %vm413, %v461, 0
    %v1081 = vsel %vm736, %v1076, 0
    %1083 = vmatprep.subr.bf16.mxu0 0
    %1084 = vmatpush1.bf16.msra.mxu0 %v1081
    %1085 = vmatprep.subr.bf16.mxu0 0
    %1086 = vmatpush1.bf16.msra.mxu0 0
    %1087 = vmatprep.subr.bf16.mxu0 0
    %1088 = vmatpush1.bf16.msra.mxu0 0
    %1089 = vmatprep.subr.bf16.mxu0 0
    %1090 = vmatpush1.bf16.msra.mxu0 0
    %1091 = vmatprep.subr.bf16.mxu0 0
    %1092 = vmatpush1.bf16.msra.mxu0 0
    %1093 = vmatprep.subr.bf16.mxu0 0
    %1094 = vmatpush1.bf16.msra.mxu0 0
    %1095 = vmatprep.subr.bf16.mxu0 0
    %1096 = vmatpush1.bf16.msra.mxu0 0
    %1097 = vmatprep.subr.bf16.mxu0 0
    %1098 = vmatpush1.bf16.msra.mxu0 0
    %1099 = vmatprep.subr.bf16.mxu0 0
    %1100 = vmatpush1.bf16.msra.mxu0 0
    %1101 = vmatprep.subr.bf16.mxu0 0
    %1102 = vmatpush1.bf16.msra.mxu0 0
    %1103 = vmatprep.subr.bf16.mxu0 0
    %1104 = vmatpush1.bf16.msra.mxu0 0
    %1105 = vmatprep.subr.bf16.mxu0 0
    %1106 = vmatpush1.bf16.msra.mxu0 0
    %1107 = vmatprep.subr.bf16.mxu0 0
    %1108 = vmatpush1.bf16.msra.mxu0 0
    %1109 = vmatprep.subr.bf16.mxu0 0
    %1110 = vmatpush1.bf16.msra.mxu0 0
    %1111 = vmatprep.subr.bf16.mxu0 0
    %1112 = vmatpush1.bf16.msra.mxu0 0
    %1113 = vmatprep.subr.bf16.mxu0 0
    %1114 = vmatpush1.bf16.msra.mxu0 0
    %1115 = vmatprep.mubr.bf16.mxu0 0
    %1116 = vmatmul.mubr.bf16.gmra.mrb[0].mxu0 %v1078
    %v1117 = vpop.f32.mrb[0].mxu0
    %v1118 = vadd.f32 %v922, %v1117
    %v1119 = vpop.f32.mrb[0].mxu0
    %v1120 = vpop.f32.mrb[0].mxu0
    %v1121 = vpop.f32.mrb[0].mxu0
    %1122 = vdwg.mxu0
    %v1123 = vld [vmem:[%s8] sm:$0x2]
    %v1125 = vpack.i.b16 %v1123, %v1123
    %v1127 = vlaneseq
    %v1128 = vshrl.u32 %v1127, 7
    %v1129 = vsub.s32 1, %v1128
    %v1130 = vrot.slane %v1125, %v1129
    %1132 = vrot.lane.b32.xlu0 %v1130, 32
    %v1133 = vpop.permute.xlu0 %1132
    %v1135 = vmul.bf16 %v170, %v1133
    %v1136 = vmul.bf16 %v171, %v1133
    %v1139 = vunpack.c.l.b16 %v1135
    %v1140 = vunpack.c.h.b16 %v1135
    %v1141 = vunpack.c.l.b16 %v1136
    %v1142 = vunpack.c.h.b16 %v1136
    %1143 = vrot.lane.b32.xlu0 %v1130, 64
    %v1144 = vpop.permute.xlu0 %1143
    %v1146 = vmul.bf16 %v170, %v1144
    %v1147 = vmul.bf16 %v171, %v1144
    %v1150 = vunpack.c.l.b16 %v1146
    %v1151 = vunpack.c.h.b16 %v1146
    %v1152 = vunpack.c.l.b16 %v1147
    %v1153 = vunpack.c.h.b16 %v1147
    %v1154 = vpack.c.b16 %v1139, %v1139
    %1155 = vrot.lane.b32.xlu0 %v1154, 96
    %v1156 = vpop.permute.xlu0 %1155
    %v1158 = vsel %vm114, %v1156, 0
    %1160 = vmatprep.subr.bf16.mxu0 0
    %1161 = vmatpush1.bf16.xpose.msra.mxu0 %v1158
    %1162 = vmatprep.subr.bf16.mxu0 0
    %1163 = vmatpush1.bf16.xpose.msra.mxu0 0
    %1164 = vmatprep.subr.bf16.mxu0 0
    %1165 = vmatpush1.bf16.xpose.msra.mxu0 0
    %1166 = vmatprep.subr.bf16.mxu0 0
    %1167 = vmatpush1.bf16.xpose.msra.mxu0 0
    %1168 = vmatprep.subr.bf16.mxu0 0
    %1169 = vmatpush1.bf16.xpose.msra.mxu0 0
    %1170 = vmatprep.subr.bf16.mxu0 0
    %1171 = vmatpush1.bf16.xpose.msra.mxu0 0
    %1172 = vmatprep.subr.bf16.mxu0 0
    %1173 = vmatpush1.bf16.xpose.msra.mxu0 0
    %1174 = vmatprep.subr.bf16.mxu0 0
    %1175 = vmatpush1.bf16.xpose.msra.mxu0 0
    %1176 = vmatprep.subr.bf16.mxu0 0
    %1177 = vmatpush1.bf16.xpose.msra.mxu0 0
    %1178 = vmatprep.subr.bf16.mxu0 0
    %1179 = vmatpush1.bf16.xpose.msra.mxu0 0
    %1180 = vmatprep.subr.bf16.mxu0 0
    %1181 = vmatpush1.bf16.xpose.msra.mxu0 0
    %1182 = vmatprep.subr.bf16.mxu0 0
    %1183 = vmatpush1.bf16.xpose.msra.mxu0 0
    %1184 = vmatprep.subr.bf16.mxu0 0
    %1185 = vmatpush1.bf16.xpose.msra.mxu0 0
    %1186 = vmatprep.subr.bf16.mxu0 0
    %1187 = vmatpush1.bf16.xpose.msra.mxu0 0
    %1188 = vmatprep.subr.bf16.mxu0 0
    %1189 = vmatpush1.bf16.xpose.msra.mxu0 0
    %1190 = vmatprep.subr.bf16.mxu0 0
    %1191 = vmatpush1.bf16.xpose.msra.mxu0 0
    %1192 = vmatprep.mubr.bf16.mxu0 0
    %1193 = vmatmul.mubr.bf16.gmra.mrb[0].mxu0 %v217
    %v1194 = vpop.f32.mrb[0].mxu0
    %v1195 = vadd.f32 0.0, %v1194
    %v1196 = vpop.f32.mrb[0].mxu0
    %v1197 = vpop.f32.mrb[0].mxu0
    %v1198 = vpop.f32.mrb[0].mxu0
    %1199 = vdwg.mxu0
    %v1200 = vpack.c.b16 %v1140, %v1140
    %1201 = vrot.lane.b32.xlu0 %v1200, 96
    %v1202 = vpop.permute.xlu0 %1201
    %v1204 = vsel %vm114, %v1202, 0
    %1206 = vmatprep.subr.bf16.mxu0 0
    %1207 = vmatpush1.bf16.xpose.msra.mxu0 %v1204
    %1208 = vmatprep.subr.bf16.mxu0 0
    %1209 = vmatpush1.bf16.xpose.msra.mxu0 0
    %1210 = vmatprep.subr.bf16.mxu0 0
    %1211 = vmatpush1.bf16.xpose.msra.mxu0 0
    %1212 = vmatprep.subr.bf16.mxu0 0
    %1213 = vmatpush1.bf16.xpose.msra.mxu0 0
    %1214 = vmatprep.subr.bf16.mxu0 0
    %1215 = vmatpush1.bf16.xpose.msra.mxu0 0
    %1216 = vmatprep.subr.bf16.mxu0 0
    %1217 = vmatpush1.bf16.xpose.msra.mxu0 0
    %1218 = vmatprep.subr.bf16.mxu0 0
    %1219 = vmatpush1.bf16.xpose.msra.mxu0 0
    %1220 = vmatprep.subr.bf16.mxu0 0
    %1221 = vmatpush1.bf16.xpose.msra.mxu0 0
    %1222 = vmatprep.subr.bf16.mxu0 0
    %1223 = vmatpush1.bf16.xpose.msra.mxu0 0
    %1224 = vmatprep.subr.bf16.mxu0 0
    %1225 = vmatpush1.bf16.xpose.msra.mxu0 0
    %1226 = vmatprep.subr.bf16.mxu0 0
    %1227 = vmatpush1.bf16.xpose.msra.mxu0 0
    %1228 = vmatprep.subr.bf16.mxu0 0
    %1229 = vmatpush1.bf16.xpose.msra.mxu0 0
    %1230 = vmatprep.subr.bf16.mxu0 0
    %1231 = vmatpush1.bf16.xpose.msra.mxu0 0
    %1232 = vmatprep.subr.bf16.mxu0 0
    %1233 = vmatpush1.bf16.xpose.msra.mxu0 0
    %1234 = vmatprep.subr.bf16.mxu0 0
    %1235 = vmatpush1.bf16.xpose.msra.mxu0 0
    %1236 = vmatprep.subr.bf16.mxu0 0
    %1237 = vmatpush1.bf16.xpose.msra.mxu0 0
    %1238 = vmatprep.mubr.bf16.mxu0 0
    %1239 = vmatmul.mubr.bf16.gmra.mrb[0].mxu0 %v266
    %v1240 = vpop.f32.mrb[0].mxu0
    %v1241 = vadd.f32 0.0, %v1240
    %v1242 = vpop.f32.mrb[0].mxu0
    %v1243 = vpop.f32.mrb[0].mxu0
    %v1244 = vpop.f32.mrb[0].mxu0
    %1245 = vdwg.mxu0
    %v1246 = vpack.c.b16 %v1141, %v1141
    %1247 = vrot.lane.b32.xlu0 %v1246, 96
    %v1248 = vpop.permute.xlu0 %1247
    %v1250 = vsel %vm114, %v1248, 0
    %1252 = vmatprep.subr.bf16.mxu0 0
    %1253 = vmatpush1.bf16.xpose.msra.mxu0 %v1250
    %1254 = vmatprep.subr.bf16.mxu0 0
    %1255 = vmatpush1.bf16.xpose.msra.mxu0 0
    %1256 = vmatprep.subr.bf16.mxu0 0
    %1257 = vmatpush1.bf16.xpose.msra.mxu0 0
    %1258 = vmatprep.subr.bf16.mxu0 0
    %1259 = vmatpush1.bf16.xpose.msra.mxu0 0
    %1260 = vmatprep.subr.bf16.mxu0 0
    %1261 = vmatpush1.bf16.xpose.msra.mxu0 0
    %1262 = vmatprep.subr.bf16.mxu0 0
    %1263 = vmatpush1.bf16.xpose.msra.mxu0 0
    %1264 = vmatprep.subr.bf16.mxu0 0
    %1265 = vmatpush1.bf16.xpose.msra.mxu0 0
    %1266 = vmatprep.subr.bf16.mxu0 0
    %1267 = vmatpush1.bf16.xpose.msra.mxu0 0
    %1268 = vmatprep.subr.bf16.mxu0 0
    %1269 = vmatpush1.bf16.xpose.msra.mxu0 0
    %1270 = vmatprep.subr.bf16.mxu0 0
    %1271 = vmatpush1.bf16.xpose.msra.mxu0 0
    %1272 = vmatprep.subr.bf16.mxu0 0
    %1273 = vmatpush1.bf16.xpose.msra.mxu0 0
    %1274 = vmatprep.subr.bf16.mxu0 0
    %1275 = vmatpush1.bf16.xpose.msra.mxu0 0
    %1276 = vmatprep.subr.bf16.mxu0 0
    %1277 = vmatpush1.bf16.xpose.msra.mxu0 0
    %1278 = vmatprep.subr.bf16.mxu0 0
    %1279 = vmatpush1.bf16.xpose.msra.mxu0 0
    %1280 = vmatprep.subr.bf16.mxu0 0
    %1281 = vmatpush1.bf16.xpose.msra.mxu0 0
    %1282 = vmatprep.subr.bf16.mxu0 0
    %1283 = vmatpush1.bf16.xpose.msra.mxu0 0
    %1284 = vmatprep.mubr.bf16.mxu0 0
    %1285 = vmatmul.mubr.bf16.gmra.mrb[0].mxu0 %v315
    %v1286 = vpop.f32.mrb[0].mxu0
    %v1287 = vadd.f32 0.0, %v1286
    %v1288 = vpop.f32.mrb[0].mxu0
    %v1289 = vpop.f32.mrb[0].mxu0
    %v1290 = vpop.f32.mrb[0].mxu0
    %1291 = vdwg.mxu0
    %v1292 = vpack.c.b16 %v1142, %v1142
    %1293 = vrot.lane.b32.xlu0 %v1292, 96
    %v1294 = vpop.permute.xlu0 %1293
    %v1296 = vsel %vm114, %v1294, 0
    %1298 = vmatprep.subr.bf16.mxu0 0
    %1299 = vmatpush1.bf16.xpose.msra.mxu0 %v1296
    %1300 = vmatprep.subr.bf16.mxu0 0
    %1301 = vmatpush1.bf16.xpose.msra.mxu0 0
    %1302 = vmatprep.subr.bf16.mxu0 0
    %1303 = vmatpush1.bf16.xpose.msra.mxu0 0
    %1304 = vmatprep.subr.bf16.mxu0 0
    %1305 = vmatpush1.bf16.xpose.msra.mxu0 0
    %1306 = vmatprep.subr.bf16.mxu0 0
    %1307 = vmatpush1.bf16.xpose.msra.mxu0 0
    %1308 = vmatprep.subr.bf16.mxu0 0
    %1309 = vmatpush1.bf16.xpose.msra.mxu0 0
    %1310 = vmatprep.subr.bf16.mxu0 0
    %1311 = vmatpush1.bf16.xpose.msra.mxu0 0
    %1312 = vmatprep.subr.bf16.mxu0 0
    %1313 = vmatpush1.bf16.xpose.msra.mxu0 0
    %1314 = vmatprep.subr.bf16.mxu0 0
    %1315 = vmatpush1.bf16.xpose.msra.mxu0 0
    %1316 = vmatprep.subr.bf16.mxu0 0
    %1317 = vmatpush1.bf16.xpose.msra.mxu0 0
    %1318 = vmatprep.subr.bf16.mxu0 0
    %1319 = vmatpush1.bf16.xpose.msra.mxu0 0
    %1320 = vmatprep.subr.bf16.mxu0 0
    %1321 = vmatpush1.bf16.xpose.msra.mxu0 0
    %1322 = vmatprep.subr.bf16.mxu0 0
    %1323 = vmatpush1.bf16.xpose.msra.mxu0 0
    %1324 = vmatprep.subr.bf16.mxu0 0
    %1325 = vmatpush1.bf16.xpose.msra.mxu0 0
    %1326 = vmatprep.subr.bf16.mxu0 0
    %1327 = vmatpush1.bf16.xpose.msra.mxu0 0
    %1328 = vmatprep.subr.bf16.mxu0 0
    %1329 = vmatpush1.bf16.xpose.msra.mxu0 0
    %1330 = vmatprep.mubr.bf16.mxu0 0
    %1331 = vmatmul.mubr.bf16.gmra.mrb[0].mxu0 %v364
    %v1332 = vpop.f32.mrb[0].mxu0
    %v1333 = vadd.f32 0.0, %v1332
    %v1334 = vpop.f32.mrb[0].mxu0
    %v1335 = vpop.f32.mrb[0].mxu0
    %v1336 = vpop.f32.mrb[0].mxu0
    %1337 = vdwg.mxu0
    %v1338 = vmul.f32 %v1195, 0.35355338
    %v1339 = vmul.f32 %v1241, 0.35355338
    %v1340 = vmul.f32 %v1287, 0.35355338
    %v1341 = vmul.f32 %v1333, 0.35355338
    %v1342 = vsel %vm413, %v1338, -inf
    %1343 = vmax.xlane.f32.xlu0 %v1342
    %v1344 = vpop.xlane.xlu0 %1343
    %v1345 = vsel %vm413, %v1339, -inf
    %1346 = vmax.xlane.f32.xlu0 %v1345
    %v1347 = vpop.xlane.xlu0 %1346
    %v1348 = vsel %vm413, %v1340, -inf
    %1349 = vmax.xlane.f32.xlu0 %v1348
    %v1350 = vpop.xlane.xlu0 %1349
    %v1351 = vsel %vm413, %v1341, -inf
    %1352 = vmax.xlane.f32.xlu0 %v1351
    %v1353 = vpop.xlane.xlu0 %1352
    %v1354 = vsub.f32 %v1338, %v1344
    %v1355 = vsub.f32 %v1339, %v1347
    %v1356 = vsub.f32 %v1340, %v1350
    %v1357 = vsub.f32 %v1341, %v1353
    %v1358 = vmul.f32 %v1354, 1.442695
    %v1359 = vpow.pop %v1358
    %v1360 = vmul.f32 %v1355, 1.442695
    %v1361 = vpow.pop %v1360
    %v1362 = vmul.f32 %v1356, 1.442695
    %v1363 = vpow.pop %v1362
    %v1364 = vmul.f32 %v1357, 1.442695
    %v1365 = vpow.pop %v1364
    %v1366 = vsel %vm413, %v1359, 0.0
    %1367 = vadd.xlane.f32.xlu0 %v1366
    %v1368 = vpop.xlane.xlu0 %1367
    %v1369 = vsel %vm413, %v1361, 0.0
    %1370 = vadd.xlane.f32.xlu0 %v1369
    %v1371 = vpop.xlane.xlu0 %1370
    %v1372 = vsel %vm413, %v1363, 0.0
    %1373 = vadd.xlane.f32.xlu0 %v1372
    %v1374 = vpop.xlane.xlu0 %1373
    %v1375 = vsel %vm413, %v1365, 0.0
    %1376 = vadd.xlane.f32.xlu0 %v1375
    %v1377 = vpop.xlane.xlu0 %1376
    %v1378 = vrcp.pop %v1368
    %v1379 = vrcp.pop %v1371
    %v1380 = vrcp.pop %v1374
    %v1381 = vrcp.pop %v1377
    %v1382 = vmul.f32 %v1359, %v1378
    %v1383 = vmul.f32 %v1361, %v1379
    %v1384 = vmul.f32 %v1363, %v1380
    %v1385 = vmul.f32 %v1365, %v1381
    %v1386 = vpack.c.bf16 %v1382, %v1382
    %v1387 = vpack.c.bf16 %v1383, %v1383
    %v1388 = vpack.c.bf16 %v1384, %v1384
    %v1389 = vpack.c.bf16 %v1385, %v1385
    %v1390 = vpack.c.b16 %v1150, %v1150
    %1391 = vrot.lane.b32.xlu0 %v1390, 64
    %v1392 = vpop.permute.xlu0 %1391
    %v1394 = vsel %vm413, %v1386, 0
    %v1397 = vsel %vm736, %v1392, 0
    %1399 = vmatprep.subr.bf16.mxu0 0
    %1400 = vmatpush1.bf16.msra.mxu0 %v1397
    %1401 = vmatprep.subr.bf16.mxu0 0
    %1402 = vmatpush1.bf16.msra.mxu0 0
    %1403 = vmatprep.subr.bf16.mxu0 0
    %1404 = vmatpush1.bf16.msra.mxu0 0
    %1405 = vmatprep.subr.bf16.mxu0 0
    %1406 = vmatpush1.bf16.msra.mxu0 0
    %1407 = vmatprep.subr.bf16.mxu0 0
    %1408 = vmatpush1.bf16.msra.mxu0 0
    %1409 = vmatprep.subr.bf16.mxu0 0
    %1410 = vmatpush1.bf16.msra.mxu0 0
    %1411 = vmatprep.subr.bf16.mxu0 0
    %1412 = vmatpush1.bf16.msra.mxu0 0
    %1413 = vmatprep.subr.bf16.mxu0 0
    %1414 = vmatpush1.bf16.msra.mxu0 0
    %1415 = vmatprep.subr.bf16.mxu0 0
    %1416 = vmatpush1.bf16.msra.mxu0 0
    %1417 = vmatprep.subr.bf16.mxu0 0
    %1418 = vmatpush1.bf16.msra.mxu0 0
    %1419 = vmatprep.subr.bf16.mxu0 0
    %1420 = vmatpush1.bf16.msra.mxu0 0
    %1421 = vmatprep.subr.bf16.mxu0 0
    %1422 = vmatpush1.bf16.msra.mxu0 0
    %1423 = vmatprep.subr.bf16.mxu0 0
    %1424 = vmatpush1.bf16.msra.mxu0 0
    %1425 = vmatprep.subr.bf16.mxu0 0
    %1426 = vmatpush1.bf16.msra.mxu0 0
    %1427 = vmatprep.subr.bf16.mxu0 0
    %1428 = vmatpush1.bf16.msra.mxu0 0
    %1429 = vmatprep.subr.bf16.mxu0 0
    %1430 = vmatpush1.bf16.msra.mxu0 0
    %1431 = vmatprep.mubr.bf16.mxu0 0
    %1432 = vmatmul.mubr.bf16.gmra.mrb[0].mxu0 %v1394
    %v1433 = vpop.f32.mrb[0].mxu0
    %v1434 = vadd.f32 0.0, %v1433
    %v1435 = vpop.f32.mrb[0].mxu0
    %v1436 = vpop.f32.mrb[0].mxu0
    %v1437 = vpop.f32.mrb[0].mxu0
    %1438 = vdwg.mxu0
    %v1439 = vpack.c.b16 %v1151, %v1151
    %1440 = vrot.lane.b32.xlu0 %v1439, 64
    %v1441 = vpop.permute.xlu0 %1440
    %v1443 = vsel %vm413, %v1387, 0
    %v1446 = vsel %vm736, %v1441, 0
    %1448 = vmatprep.subr.bf16.mxu0 0
    %1449 = vmatpush1.bf16.msra.mxu0 %v1446
    %1450 = vmatprep.subr.bf16.mxu0 0
    %1451 = vmatpush1.bf16.msra.mxu0 0
    %1452 = vmatprep.subr.bf16.mxu0 0
    %1453 = vmatpush1.bf16.msra.mxu0 0
    %1454 = vmatprep.subr.bf16.mxu0 0
    %1455 = vmatpush1.bf16.msra.mxu0 0
    %1456 = vmatprep.subr.bf16.mxu0 0
    %1457 = vmatpush1.bf16.msra.mxu0 0
    %1458 = vmatprep.subr.bf16.mxu0 0
    %1459 = vmatpush1.bf16.msra.mxu0 0
    %1460 = vmatprep.subr.bf16.mxu0 0
    %1461 = vmatpush1.bf16.msra.mxu0 0
    %1462 = vmatprep.subr.bf16.mxu0 0
    %1463 = vmatpush1.bf16.msra.mxu0 0
    %1464 = vmatprep.subr.bf16.mxu0 0
    %1465 = vmatpush1.bf16.msra.mxu0 0
    %1466 = vmatprep.subr.bf16.mxu0 0
    %1467 = vmatpush1.bf16.msra.mxu0 0
    %1468 = vmatprep.subr.bf16.mxu0 0
    %1469 = vmatpush1.bf16.msra.mxu0 0
    %1470 = vmatprep.subr.bf16.mxu0 0
    %1471 = vmatpush1.bf16.msra.mxu0 0
    %1472 = vmatprep.subr.bf16.mxu0 0
    %1473 = vmatpush1.bf16.msra.mxu0 0
    %1474 = vmatprep.subr.bf16.mxu0 0
    %1475 = vmatpush1.bf16.msra.mxu0 0
    %1476 = vmatprep.subr.bf16.mxu0 0
    %1477 = vmatpush1.bf16.msra.mxu0 0
    %1478 = vmatprep.subr.bf16.mxu0 0
    %1479 = vmatpush1.bf16.msra.mxu0 0
    %1480 = vmatprep.mubr.bf16.mxu0 0
    %1481 = vmatmul.mubr.bf16.gmra.mrb[0].mxu0 %v1443
    %v1482 = vpop.f32.mrb[0].mxu0
    %v1483 = vadd.f32 0.0, %v1482
    %v1484 = vpop.f32.mrb[0].mxu0
    %v1485 = vpop.f32.mrb[0].mxu0
    %v1486 = vpop.f32.mrb[0].mxu0
    %1487 = vdwg.mxu0
    %v1488 = vpack.c.b16 %v1152, %v1152
    %1489 = vrot.lane.b32.xlu0 %v1488, 64
    %v1490 = vpop.permute.xlu0 %1489
    %v1492 = vsel %vm413, %v1388, 0
    %v1495 = vsel %vm736, %v1490, 0
    %1497 = vmatprep.subr.bf16.mxu0 0
    %1498 = vmatpush1.bf16.msra.mxu0 %v1495
    %1499 = vmatprep.subr.bf16.mxu0 0
    %1500 = vmatpush1.bf16.msra.mxu0 0
    %1501 = vmatprep.subr.bf16.mxu0 0
    %1502 = vmatpush1.bf16.msra.mxu0 0
    %1503 = vmatprep.subr.bf16.mxu0 0
    %1504 = vmatpush1.bf16.msra.mxu0 0
    %1505 = vmatprep.subr.bf16.mxu0 0
    %1506 = vmatpush1.bf16.msra.mxu0 0
    %1507 = vmatprep.subr.bf16.mxu0 0
    %1508 = vmatpush1.bf16.msra.mxu0 0
    %1509 = vmatprep.subr.bf16.mxu0 0
    %1510 = vmatpush1.bf16.msra.mxu0 0
    %1511 = vmatprep.subr.bf16.mxu0 0
    %1512 = vmatpush1.bf16.msra.mxu0 0
    %1513 = vmatprep.subr.bf16.mxu0 0
    %1514 = vmatpush1.bf16.msra.mxu0 0
    %1515 = vmatprep.subr.bf16.mxu0 0
    %1516 = vmatpush1.bf16.msra.mxu0 0
    %1517 = vmatprep.subr.bf16.mxu0 0
    %1518 = vmatpush1.bf16.msra.mxu0 0
    %1519 = vmatprep.subr.bf16.mxu0 0
    %1520 = vmatpush1.bf16.msra.mxu0 0
    %1521 = vmatprep.subr.bf16.mxu0 0
    %1522 = vmatpush1.bf16.msra.mxu0 0
    %1523 = vmatprep.subr.bf16.mxu0 0
    %1524 = vmatpush1.bf16.msra.mxu0 0
    %1525 = vmatprep.subr.bf16.mxu0 0
    %1526 = vmatpush1.bf16.msra.mxu0 0
    %1527 = vmatprep.subr.bf16.mxu0 0
    %1528 = vmatpush1.bf16.msra.mxu0 0
    %1529 = vmatprep.mubr.bf16.mxu0 0
    %1530 = vmatmul.mubr.bf16.gmra.mrb[0].mxu0 %v1492
    %v1531 = vpop.f32.mrb[0].mxu0
    %v1532 = vadd.f32 0.0, %v1531
    %v1533 = vpop.f32.mrb[0].mxu0
    %v1534 = vpop.f32.mrb[0].mxu0
    %v1535 = vpop.f32.mrb[0].mxu0
    %1536 = vdwg.mxu0
    %v1537 = vpack.c.b16 %v1153, %v1153
    %1538 = vrot.lane.b32.xlu0 %v1537, 64
    %v1539 = vpop.permute.xlu0 %1538
    %v1541 = vsel %vm413, %v1389, 0
    %v1544 = vsel %vm736, %v1539, 0
    %1546 = vmatprep.subr.bf16.mxu0 0
    %1547 = vmatpush1.bf16.msra.mxu0 %v1544
    %1548 = vmatprep.subr.bf16.mxu0 0
    %1549 = vmatpush1.bf16.msra.mxu0 0
    %1550 = vmatprep.subr.bf16.mxu0 0
    %1551 = vmatpush1.bf16.msra.mxu0 0
    %1552 = vmatprep.subr.bf16.mxu0 0
    %1553 = vmatpush1.bf16.msra.mxu0 0
    %1554 = vmatprep.subr.bf16.mxu0 0
    %1555 = vmatpush1.bf16.msra.mxu0 0
    %1556 = vmatprep.subr.bf16.mxu0 0
    %1557 = vmatpush1.bf16.msra.mxu0 0
    %1558 = vmatprep.subr.bf16.mxu0 0
    %1559 = vmatpush1.bf16.msra.mxu0 0
    %1560 = vmatprep.subr.bf16.mxu0 0
    %1561 = vmatpush1.bf16.msra.mxu0 0
    %1562 = vmatprep.subr.bf16.mxu0 0
    %1563 = vmatpush1.bf16.msra.mxu0 0
    %1564 = vmatprep.subr.bf16.mxu0 0
    %1565 = vmatpush1.bf16.msra.mxu0 0
    %1566 = vmatprep.subr.bf16.mxu0 0
    %1567 = vmatpush1.bf16.msra.mxu0 0
    %1568 = vmatprep.subr.bf16.mxu0 0
    %1569 = vmatpush1.bf16.msra.mxu0 0
    %1570 = vmatprep.subr.bf16.mxu0 0
    %1571 = vmatpush1.bf16.msra.mxu0 0
    %1572 = vmatprep.subr.bf16.mxu0 0
    %1573 = vmatpush1.bf16.msra.mxu0 0
    %1574 = vmatprep.subr.bf16.mxu0 0
    %1575 = vmatpush1.bf16.msra.mxu0 0
    %1576 = vmatprep.subr.bf16.mxu0 0
    %1577 = vmatpush1.bf16.msra.mxu0 0
    %1578 = vmatprep.mubr.bf16.mxu0 0
    %1579 = vmatmul.mubr.bf16.gmra.mrb[0].mxu0 %v1541
    %v1580 = vpop.f32.mrb[0].mxu0
    %v1581 = vadd.f32 0.0, %v1580
    %v1582 = vpop.f32.mrb[0].mxu0
    %v1583 = vpop.f32.mrb[0].mxu0
    %v1584 = vpop.f32.mrb[0].mxu0
    %1585 = vdwg.mxu0
    %v1586 = vadd.f32 %v971, %v1434
    %v1587 = vadd.f32 %v1020, %v1483
    %v1588 = vadd.f32 %v1069, %v1532
    %v1589 = vadd.f32 %v1118, %v1581
    %v1590 = vld [vmem:[%s8] sm:$0x2]
    %v1592 = vshrl.u32 %v1590, 16
    %v1593 = vpack.i.b16 %v1592, %v1592
    %v1595 = vlaneseq
    %v1596 = vshrl.u32 %v1595, 7
    %v1597 = vsub.s32 1, %v1596
    %v1598 = vrot.slane %v1593, %v1597
    %1600 = vrot.lane.b32.xlu0 %v1598, 32
    %v1601 = vpop.permute.xlu0 %1600
    %v1603 = vmul.bf16 %v170, %v1601
    %v1604 = vmul.bf16 %v171, %v1601
    %v1607 = vunpack.c.l.b16 %v1603
    %v1608 = vunpack.c.h.b16 %v1603
    %v1609 = vunpack.c.l.b16 %v1604
    %v1610 = vunpack.c.h.b16 %v1604
    %1611 = vrot.lane.b32.xlu0 %v1598, 64
    %v1612 = vpop.permute.xlu0 %1611
    %v1614 = vmul.bf16 %v170, %v1612
    %v1615 = vmul.bf16 %v171, %v1612
    %v1618 = vunpack.c.l.b16 %v1614
    %v1619 = vunpack.c.h.b16 %v1614
    %v1620 = vunpack.c.l.b16 %v1615
    %v1621 = vunpack.c.h.b16 %v1615
    %v1622 = vpack.c.b16 %v1607, %v1607
    %1623 = vrot.lane.b32.xlu0 %v1622, 96
    %v1624 = vpop.permute.xlu0 %1623
    %v1626 = vsel %vm114, %v1624, 0
    %1628 = vmatprep.subr.bf16.mxu0 0
    %1629 = vmatpush1.bf16.xpose.msra.mxu0 %v1626
    %1630 = vmatprep.subr.bf16.mxu0 0
    %1631 = vmatpush1.bf16.xpose.msra.mxu0 0
    %1632 = vmatprep.subr.bf16.mxu0 0
    %1633 = vmatpush1.bf16.xpose.msra.mxu0 0
    %1634 = vmatprep.subr.bf16.mxu0 0
    %1635 = vmatpush1.bf16.xpose.msra.mxu0 0
    %1636 = vmatprep.subr.bf16.mxu0 0
    %1637 = vmatpush1.bf16.xpose.msra.mxu0 0
    %1638 = vmatprep.subr.bf16.mxu0 0
    %1639 = vmatpush1.bf16.xpose.msra.mxu0 0
    %1640 = vmatprep.subr.bf16.mxu0 0
    %1641 = vmatpush1.bf16.xpose.msra.mxu0 0
    %1642 = vmatprep.subr.bf16.mxu0 0
    %1643 = vmatpush1.bf16.xpose.msra.mxu0 0
    %1644 = vmatprep.subr.bf16.mxu0 0
    %1645 = vmatpush1.bf16.xpose.msra.mxu0 0
    %1646 = vmatprep.subr.bf16.mxu0 0
    %1647 = vmatpush1.bf16.xpose.msra.mxu0 0
    %1648 = vmatprep.subr.bf16.mxu0 0
    %1649 = vmatpush1.bf16.xpose.msra.mxu0 0
    %1650 = vmatprep.subr.bf16.mxu0 0
    %1651 = vmatpush1.bf16.xpose.msra.mxu0 0
    %1652 = vmatprep.subr.bf16.mxu0 0
    %1653 = vmatpush1.bf16.xpose.msra.mxu0 0
    %1654 = vmatprep.subr.bf16.mxu0 0
    %1655 = vmatpush1.bf16.xpose.msra.mxu0 0
    %1656 = vmatprep.subr.bf16.mxu0 0
    %1657 = vmatpush1.bf16.xpose.msra.mxu0 0
    %1658 = vmatprep.subr.bf16.mxu0 0
    %1659 = vmatpush1.bf16.xpose.msra.mxu0 0
    %1660 = vmatprep.mubr.bf16.mxu0 0
    %1661 = vmatmul.mubr.bf16.gmra.mrb[0].mxu0 %v217
    %v1662 = vpop.f32.mrb[0].mxu0
    %v1663 = vadd.f32 0.0, %v1662
    %v1664 = vpop.f32.mrb[0].mxu0
    %v1665 = vpop.f32.mrb[0].mxu0
    %v1666 = vpop.f32.mrb[0].mxu0
    %1667 = vdwg.mxu0
    %v1668 = vpack.c.b16 %v1608, %v1608
    %1669 = vrot.lane.b32.xlu0 %v1668, 96
    %v1670 = vpop.permute.xlu0 %1669
    %v1672 = vsel %vm114, %v1670, 0
    %1674 = vmatprep.subr.bf16.mxu0 0
    %1675 = vmatpush1.bf16.xpose.msra.mxu0 %v1672
    %1676 = vmatprep.subr.bf16.mxu0 0
    %1677 = vmatpush1.bf16.xpose.msra.mxu0 0
    %1678 = vmatprep.subr.bf16.mxu0 0
    %1679 = vmatpush1.bf16.xpose.msra.mxu0 0
    %1680 = vmatprep.subr.bf16.mxu0 0
    %1681 = vmatpush1.bf16.xpose.msra.mxu0 0
    %1682 = vmatprep.subr.bf16.mxu0 0
    %1683 = vmatpush1.bf16.xpose.msra.mxu0 0
    %1684 = vmatprep.subr.bf16.mxu0 0
    %1685 = vmatpush1.bf16.xpose.msra.mxu0 0
    %1686 = vmatprep.subr.bf16.mxu0 0
    %1687 = vmatpush1.bf16.xpose.msra.mxu0 0
    %1688 = vmatprep.subr.bf16.mxu0 0
    %1689 = vmatpush1.bf16.xpose.msra.mxu0 0
    %1690 = vmatprep.subr.bf16.mxu0 0
    %1691 = vmatpush1.bf16.xpose.msra.mxu0 0
    %1692 = vmatprep.subr.bf16.mxu0 0
    %1693 = vmatpush1.bf16.xpose.msra.mxu0 0
    %1694 = vmatprep.subr.bf16.mxu0 0
    %1695 = vmatpush1.bf16.xpose.msra.mxu0 0
    %1696 = vmatprep.subr.bf16.mxu0 0
    %1697 = vmatpush1.bf16.xpose.msra.mxu0 0
    %1698 = vmatprep.subr.bf16.mxu0 0
    %1699 = vmatpush1.bf16.xpose.msra.mxu0 0
    %1700 = vmatprep.subr.bf16.mxu0 0
    %1701 = vmatpush1.bf16.xpose.msra.mxu0 0
    %1702 = vmatprep.subr.bf16.mxu0 0
    %1703 = vmatpush1.bf16.xpose.msra.mxu0 0
    %1704 = vmatprep.subr.bf16.mxu0 0
    %1705 = vmatpush1.bf16.xpose.msra.mxu0 0
    %1706 = vmatprep.mubr.bf16.mxu0 0
    %1707 = vmatmul.mubr.bf16.gmra.mrb[0].mxu0 %v266
    %v1708 = vpop.f32.mrb[0].mxu0
    %v1709 = vadd.f32 0.0, %v1708
    %v1710 = vpop.f32.mrb[0].mxu0
    %v1711 = vpop.f32.mrb[0].mxu0
    %v1712 = vpop.f32.mrb[0].mxu0
    %1713 = vdwg.mxu0
    %v1714 = vpack.c.b16 %v1609, %v1609
    %1715 = vrot.lane.b32.xlu0 %v1714, 96
    %v1716 = vpop.permute.xlu0 %1715
    %v1718 = vsel %vm114, %v1716, 0
    %1720 = vmatprep.subr.bf16.mxu0 0
    %1721 = vmatpush1.bf16.xpose.msra.mxu0 %v1718
    %1722 = vmatprep.subr.bf16.mxu0 0
    %1723 = vmatpush1.bf16.xpose.msra.mxu0 0
    %1724 = vmatprep.subr.bf16.mxu0 0
    %1725 = vmatpush1.bf16.xpose.msra.mxu0 0
    %1726 = vmatprep.subr.bf16.mxu0 0
    %1727 = vmatpush1.bf16.xpose.msra.mxu0 0
    %1728 = vmatprep.subr.bf16.mxu0 0
    %1729 = vmatpush1.bf16.xpose.msra.mxu0 0
    %1730 = vmatprep.subr.bf16.mxu0 0
    %1731 = vmatpush1.bf16.xpose.msra.mxu0 0
    %1732 = vmatprep.subr.bf16.mxu0 0
    %1733 = vmatpush1.bf16.xpose.msra.mxu0 0
    %1734 = vmatprep.subr.bf16.mxu0 0
    %1735 = vmatpush1.bf16.xpose.msra.mxu0 0
    %1736 = vmatprep.subr.bf16.mxu0 0
    %1737 = vmatpush1.bf16.xpose.msra.mxu0 0
    %1738 = vmatprep.subr.bf16.mxu0 0
    %1739 = vmatpush1.bf16.xpose.msra.mxu0 0
    %1740 = vmatprep.subr.bf16.mxu0 0
    %1741 = vmatpush1.bf16.xpose.msra.mxu0 0
    %1742 = vmatprep.subr.bf16.mxu0 0
    %1743 = vmatpush1.bf16.xpose.msra.mxu0 0
    %1744 = vmatprep.subr.bf16.mxu0 0
    %1745 = vmatpush1.bf16.xpose.msra.mxu0 0
    %1746 = vmatprep.subr.bf16.mxu0 0
    %1747 = vmatpush1.bf16.xpose.msra.mxu0 0
    %1748 = vmatprep.subr.bf16.mxu0 0
    %1749 = vmatpush1.bf16.xpose.msra.mxu0 0
    %1750 = vmatprep.subr.bf16.mxu0 0
    %1751 = vmatpush1.bf16.xpose.msra.mxu0 0
    %1752 = vmatprep.mubr.bf16.mxu0 0
    %1753 = vmatmul.mubr.bf16.gmra.mrb[0].mxu0 %v315
    %v1754 = vpop.f32.mrb[0].mxu0
    %v1755 = vadd.f32 0.0, %v1754
    %v1756 = vpop.f32.mrb[0].mxu0
    %v1757 = vpop.f32.mrb[0].mxu0
    %v1758 = vpop.f32.mrb[0].mxu0
    %1759 = vdwg.mxu0
    %v1760 = vpack.c.b16 %v1610, %v1610
    %1761 = vrot.lane.b32.xlu0 %v1760, 96
    %v1762 = vpop.permute.xlu0 %1761
    %v1764 = vsel %vm114, %v1762, 0
    %1766 = vmatprep.subr.bf16.mxu0 0
    %1767 = vmatpush1.bf16.xpose.msra.mxu0 %v1764
    %1768 = vmatprep.subr.bf16.mxu0 0
    %1769 = vmatpush1.bf16.xpose.msra.mxu0 0
    %1770 = vmatprep.subr.bf16.mxu0 0
    %1771 = vmatpush1.bf16.xpose.msra.mxu0 0
    %1772 = vmatprep.subr.bf16.mxu0 0
    %1773 = vmatpush1.bf16.xpose.msra.mxu0 0
    %1774 = vmatprep.subr.bf16.mxu0 0
    %1775 = vmatpush1.bf16.xpose.msra.mxu0 0
    %1776 = vmatprep.subr.bf16.mxu0 0
    %1777 = vmatpush1.bf16.xpose.msra.mxu0 0
    %1778 = vmatprep.subr.bf16.mxu0 0
    %1779 = vmatpush1.bf16.xpose.msra.mxu0 0
    %1780 = vmatprep.subr.bf16.mxu0 0
    %1781 = vmatpush1.bf16.xpose.msra.mxu0 0
    %1782 = vmatprep.subr.bf16.mxu0 0
    %1783 = vmatpush1.bf16.xpose.msra.mxu0 0
    %1784 = vmatprep.subr.bf16.mxu0 0
    %1785 = vmatpush1.bf16.xpose.msra.mxu0 0
    %1786 = vmatprep.subr.bf16.mxu0 0
    %1787 = vmatpush1.bf16.xpose.msra.mxu0 0
    %1788 = vmatprep.subr.bf16.mxu0 0
    %1789 = vmatpush1.bf16.xpose.msra.mxu0 0
    %1790 = vmatprep.subr.bf16.mxu0 0
    %1791 = vmatpush1.bf16.xpose.msra.mxu0 0
    %1792 = vmatprep.subr.bf16.mxu0 0
    %1793 = vmatpush1.bf16.xpose.msra.mxu0 0
    %1794 = vmatprep.subr.bf16.mxu0 0
    %1795 = vmatpush1.bf16.xpose.msra.mxu0 0
    %1796 = vmatprep.subr.bf16.mxu0 0
    %1797 = vmatpush1.bf16.xpose.msra.mxu0 0
    %1798 = vmatprep.mubr.bf16.mxu0 0
    %1799 = vmatmul.mubr.bf16.gmra.mrb[0].mxu0 %v364
    %v1800 = vpop.f32.mrb[0].mxu0
    %v1801 = vadd.f32 0.0, %v1800
    %v1802 = vpop.f32.mrb[0].mxu0
    %v1803 = vpop.f32.mrb[0].mxu0
    %v1804 = vpop.f32.mrb[0].mxu0
    %1805 = vdwg.mxu0
    %v1806 = vmul.f32 %v1663, 0.35355338
    %v1807 = vmul.f32 %v1709, 0.35355338
    %v1808 = vmul.f32 %v1755, 0.35355338
    %v1809 = vmul.f32 %v1801, 0.35355338
    %v1810 = vsel %vm413, %v1806, -inf
    %1811 = vmax.xlane.f32.xlu0 %v1810
    %v1812 = vpop.xlane.xlu0 %1811
    %v1813 = vsel %vm413, %v1807, -inf
    %1814 = vmax.xlane.f32.xlu0 %v1813
    %v1815 = vpop.xlane.xlu0 %1814
    %v1816 = vsel %vm413, %v1808, -inf
    %1817 = vmax.xlane.f32.xlu0 %v1816
    %v1818 = vpop.xlane.xlu0 %1817
    %v1819 = vsel %vm413, %v1809, -inf
    %1820 = vmax.xlane.f32.xlu0 %v1819
    %v1821 = vpop.xlane.xlu0 %1820
    %v1822 = vsub.f32 %v1806, %v1812
    %v1823 = vsub.f32 %v1807, %v1815
    %v1824 = vsub.f32 %v1808, %v1818
    %v1825 = vsub.f32 %v1809, %v1821
    %v1826 = vmul.f32 %v1822, 1.442695
    %v1827 = vpow.pop %v1826
    %v1828 = vmul.f32 %v1823, 1.442695
    %v1829 = vpow.pop %v1828
    %v1830 = vmul.f32 %v1824, 1.442695
    %v1831 = vpow.pop %v1830
    %v1832 = vmul.f32 %v1825, 1.442695
    %v1833 = vpow.pop %v1832
    %v1834 = vsel %vm413, %v1827, 0.0
    %1835 = vadd.xlane.f32.xlu0 %v1834
    %v1836 = vpop.xlane.xlu0 %1835
    %v1837 = vsel %vm413, %v1829, 0.0
    %1838 = vadd.xlane.f32.xlu0 %v1837
    %v1839 = vpop.xlane.xlu0 %1838
    %v1840 = vsel %vm413, %v1831, 0.0
    %1841 = vadd.xlane.f32.xlu0 %v1840
    %v1842 = vpop.xlane.xlu0 %1841
    %v1843 = vsel %vm413, %v1833, 0.0
    %1844 = vadd.xlane.f32.xlu0 %v1843
    %v1845 = vpop.xlane.xlu0 %1844
    %v1846 = vrcp.pop %v1836
    %v1847 = vrcp.pop %v1839
    %v1848 = vrcp.pop %v1842
    %v1849 = vrcp.pop %v1845
    %v1850 = vmul.f32 %v1827, %v1846
    %v1851 = vmul.f32 %v1829, %v1847
    %v1852 = vmul.f32 %v1831, %v1848
    %v1853 = vmul.f32 %v1833, %v1849
    %v1854 = vpack.c.bf16 %v1850, %v1850
    %v1855 = vpack.c.bf16 %v1851, %v1851
    %v1856 = vpack.c.bf16 %v1852, %v1852
    %v1857 = vpack.c.bf16 %v1853, %v1853
    %v1858 = vpack.c.b16 %v1618, %v1618
    %1859 = vrot.lane.b32.xlu0 %v1858, 64
    %v1860 = vpop.permute.xlu0 %1859
    %v1862 = vsel %vm413, %v1854, 0
    %v1865 = vsel %vm736, %v1860, 0
    %1867 = vmatprep.subr.bf16.mxu0 0
    %1868 = vmatpush1.bf16.msra.mxu0 %v1865
    %1869 = vmatprep.subr.bf16.mxu0 0
    %1870 = vmatpush1.bf16.msra.mxu0 0
    %1871 = vmatprep.subr.bf16.mxu0 0
    %1872 = vmatpush1.bf16.msra.mxu0 0
    %1873 = vmatprep.subr.bf16.mxu0 0
    %1874 = vmatpush1.bf16.msra.mxu0 0
    %1875 = vmatprep.subr.bf16.mxu0 0
    %1876 = vmatpush1.bf16.msra.mxu0 0
    %1877 = vmatprep.subr.bf16.mxu0 0
    %1878 = vmatpush1.bf16.msra.mxu0 0
    %1879 = vmatprep.subr.bf16.mxu0 0
    %1880 = vmatpush1.bf16.msra.mxu0 0
    %1881 = vmatprep.subr.bf16.mxu0 0
    %1882 = vmatpush1.bf16.msra.mxu0 0
    %1883 = vmatprep.subr.bf16.mxu0 0
    %1884 = vmatpush1.bf16.msra.mxu0 0
    %1885 = vmatprep.subr.bf16.mxu0 0
    %1886 = vmatpush1.bf16.msra.mxu0 0
    %1887 = vmatprep.subr.bf16.mxu0 0
    %1888 = vmatpush1.bf16.msra.mxu0 0
    %1889 = vmatprep.subr.bf16.mxu0 0
    %1890 = vmatpush1.bf16.msra.mxu0 0
    %1891 = vmatprep.subr.bf16.mxu0 0
    %1892 = vmatpush1.bf16.msra.mxu0 0
    %1893 = vmatprep.subr.bf16.mxu0 0
    %1894 = vmatpush1.bf16.msra.mxu0 0
    %1895 = vmatprep.subr.bf16.mxu0 0
    %1896 = vmatpush1.bf16.msra.mxu0 0
    %1897 = vmatprep.subr.bf16.mxu0 0
    %1898 = vmatpush1.bf16.msra.mxu0 0
    %1899 = vmatprep.mubr.bf16.mxu0 0
    %1900 = vmatmul.mubr.bf16.gmra.mrb[0].mxu0 %v1862
    %v1901 = vpop.f32.mrb[0].mxu0
    %v1902 = vadd.f32 0.0, %v1901
    %v1903 = vpop.f32.mrb[0].mxu0
    %v1904 = vpop.f32.mrb[0].mxu0
    %v1905 = vpop.f32.mrb[0].mxu0
    %1906 = vdwg.mxu0
    %v1907 = vpack.c.b16 %v1619, %v1619
    %1908 = vrot.lane.b32.xlu0 %v1907, 64
    %v1909 = vpop.permute.xlu0 %1908
    %v1911 = vsel %vm413, %v1855, 0
    %v1914 = vsel %vm736, %v1909, 0
    %1916 = vmatprep.subr.bf16.mxu0 0
    %1917 = vmatpush1.bf16.msra.mxu0 %v1914
    %1918 = vmatprep.subr.bf16.mxu0 0
    %1919 = vmatpush1.bf16.msra.mxu0 0
    %1920 = vmatprep.subr.bf16.mxu0 0
    %1921 = vmatpush1.bf16.msra.mxu0 0
    %1922 = vmatprep.subr.bf16.mxu0 0
    %1923 = vmatpush1.bf16.msra.mxu0 0
    %1924 = vmatprep.subr.bf16.mxu0 0
    %1925 = vmatpush1.bf16.msra.mxu0 0
    %1926 = vmatprep.subr.bf16.mxu0 0
    %1927 = vmatpush1.bf16.msra.mxu0 0
    %1928 = vmatprep.subr.bf16.mxu0 0
    %1929 = vmatpush1.bf16.msra.mxu0 0
    %1930 = vmatprep.subr.bf16.mxu0 0
    %1931 = vmatpush1.bf16.msra.mxu0 0
    %1932 = vmatprep.subr.bf16.mxu0 0
    %1933 = vmatpush1.bf16.msra.mxu0 0
    %1934 = vmatprep.subr.bf16.mxu0 0
    %1935 = vmatpush1.bf16.msra.mxu0 0
    %1936 = vmatprep.subr.bf16.mxu0 0
    %1937 = vmatpush1.bf16.msra.mxu0 0
    %1938 = vmatprep.subr.bf16.mxu0 0
    %1939 = vmatpush1.bf16.msra.mxu0 0
    %1940 = vmatprep.subr.bf16.mxu0 0
    %1941 = vmatpush1.bf16.msra.mxu0 0
    %1942 = vmatprep.subr.bf16.mxu0 0
    %1943 = vmatpush1.bf16.msra.mxu0 0
    %1944 = vmatprep.subr.bf16.mxu0 0
    %1945 = vmatpush1.bf16.msra.mxu0 0
    %1946 = vmatprep.subr.bf16.mxu0 0
    %1947 = vmatpush1.bf16.msra.mxu0 0
    %1948 = vmatprep.mubr.bf16.mxu0 0
    %1949 = vmatmul.mubr.bf16.gmra.mrb[0].mxu0 %v1911
    %v1950 = vpop.f32.mrb[0].mxu0
    %v1951 = vadd.f32 0.0, %v1950
    %v1952 = vpop.f32.mrb[0].mxu0
    %v1953 = vpop.f32.mrb[0].mxu0
    %v1954 = vpop.f32.mrb[0].mxu0
    %1955 = vdwg.mxu0
    %v1956 = vpack.c.b16 %v1620, %v1620
    %1957 = vrot.lane.b32.xlu0 %v1956, 64
    %v1958 = vpop.permute.xlu0 %1957
    %v1960 = vsel %vm413, %v1856, 0
    %v1963 = vsel %vm736, %v1958, 0
    %1965 = vmatprep.subr.bf16.mxu0 0
    %1966 = vmatpush1.bf16.msra.mxu0 %v1963
    %1967 = vmatprep.subr.bf16.mxu0 0
    %1968 = vmatpush1.bf16.msra.mxu0 0
    %1969 = vmatprep.subr.bf16.mxu0 0
    %1970 = vmatpush1.bf16.msra.mxu0 0
    %1971 = vmatprep.subr.bf16.mxu0 0
    %1972 = vmatpush1.bf16.msra.mxu0 0
    %1973 = vmatprep.subr.bf16.mxu0 0
    %1974 = vmatpush1.bf16.msra.mxu0 0
    %1975 = vmatprep.subr.bf16.mxu0 0
    %1976 = vmatpush1.bf16.msra.mxu0 0
    %1977 = vmatprep.subr.bf16.mxu0 0
    %1978 = vmatpush1.bf16.msra.mxu0 0
    %1979 = vmatprep.subr.bf16.mxu0 0
    %1980 = vmatpush1.bf16.msra.mxu0 0
    %1981 = vmatprep.subr.bf16.mxu0 0
    %1982 = vmatpush1.bf16.msra.mxu0 0
    %1983 = vmatprep.subr.bf16.mxu0 0
    %1984 = vmatpush1.bf16.msra.mxu0 0
    %1985 = vmatprep.subr.bf16.mxu0 0
    %1986 = vmatpush1.bf16.msra.mxu0 0
    %1987 = vmatprep.subr.bf16.mxu0 0
    %1988 = vmatpush1.bf16.msra.mxu0 0
    %1989 = vmatprep.subr.bf16.mxu0 0
    %1990 = vmatpush1.bf16.msra.mxu0 0
    %1991 = vmatprep.subr.bf16.mxu0 0
    %1992 = vmatpush1.bf16.msra.mxu0 0
    %1993 = vmatprep.subr.bf16.mxu0 0
    %1994 = vmatpush1.bf16.msra.mxu0 0
    %1995 = vmatprep.subr.bf16.mxu0 0
    %1996 = vmatpush1.bf16.msra.mxu0 0
    %1997 = vmatprep.mubr.bf16.mxu0 0
    %1998 = vmatmul.mubr.bf16.gmra.mrb[0].mxu0 %v1960
    %v1999 = vpop.f32.mrb[0].mxu0
    %v2000 = vadd.f32 0.0, %v1999
    %v2001 = vpop.f32.mrb[0].mxu0
    %v2002 = vpop.f32.mrb[0].mxu0
    %v2003 = vpop.f32.mrb[0].mxu0
    %2004 = vdwg.mxu0
    %v2005 = vpack.c.b16 %v1621, %v1621
    %2006 = vrot.lane.b32.xlu0 %v2005, 64
    %v2007 = vpop.permute.xlu0 %2006
    %v2009 = vsel %vm413, %v1857, 0
    %v2012 = vsel %vm736, %v2007, 0
    %2014 = vmatprep.subr.bf16.mxu0 0
    %2015 = vmatpush1.bf16.msra.mxu0 %v2012
    %2016 = vmatprep.subr.bf16.mxu0 0
    %2017 = vmatpush1.bf16.msra.mxu0 0
    %2018 = vmatprep.subr.bf16.mxu0 0
    %2019 = vmatpush1.bf16.msra.mxu0 0
    %2020 = vmatprep.subr.bf16.mxu0 0
    %2021 = vmatpush1.bf16.msra.mxu0 0
    %2022 = vmatprep.subr.bf16.mxu0 0
    %2023 = vmatpush1.bf16.msra.mxu0 0
    %2024 = vmatprep.subr.bf16.mxu0 0
    %2025 = vmatpush1.bf16.msra.mxu0 0
    %2026 = vmatprep.subr.bf16.mxu0 0
    %2027 = vmatpush1.bf16.msra.mxu0 0
    %2028 = vmatprep.subr.bf16.mxu0 0
    %2029 = vmatpush1.bf16.msra.mxu0 0
    %2030 = vmatprep.subr.bf16.mxu0 0
    %2031 = vmatpush1.bf16.msra.mxu0 0
    %2032 = vmatprep.subr.bf16.mxu0 0
    %2033 = vmatpush1.bf16.msra.mxu0 0
    %2034 = vmatprep.subr.bf16.mxu0 0
    %2035 = vmatpush1.bf16.msra.mxu0 0
    %2036 = vmatprep.subr.bf16.mxu0 0
    %2037 = vmatpush1.bf16.msra.mxu0 0
    %2038 = vmatprep.subr.bf16.mxu0 0
    %2039 = vmatpush1.bf16.msra.mxu0 0
    %2040 = vmatprep.subr.bf16.mxu0 0
    %2041 = vmatpush1.bf16.msra.mxu0 0
    %2042 = vmatprep.subr.bf16.mxu0 0
    %2043 = vmatpush1.bf16.msra.mxu0 0
    %2044 = vmatprep.subr.bf16.mxu0 0
    %2045 = vmatpush1.bf16.msra.mxu0 0
    %2046 = vmatprep.mubr.bf16.mxu0 0
    %2047 = vmatmul.mubr.bf16.gmra.mrb[0].mxu0 %v2009
    %v2048 = vpop.f32.mrb[0].mxu0
    %v2049 = vadd.f32 0.0, %v2048
    %v2050 = vpop.f32.mrb[0].mxu0
    %v2051 = vpop.f32.mrb[0].mxu0
    %v2052 = vpop.f32.mrb[0].mxu0
    %2053 = vdwg.mxu0
    %v2054 = vadd.f32 %v1586, %v1902
    %v2055 = vadd.f32 %v1587, %v1951
    %v2056 = vadd.f32 %v1588, %v2000
    %v2057 = vadd.f32 %v1589, %v2049
    %v2058 = vpack.c.bf16 %v2055, %v2054
    %v2059 = vpack.c.bf16 %v2057, %v2056
    %v2060 = vld [vmem:[#allocation5] sm:$0xf]
    %v2061 = vld [vmem:[#allocation5 + $0x4] sm:$0xf]
    %v2062 = vld [vmem:[#allocation5 + $0x8] sm:$0xf]
    %v2063 = vld [vmem:[#allocation5 + $0xc] sm:$0xf]
    %v2064 = vld [vmem:[%s7] sm:$0x1]
    %v2065 = vlaneseq
    %v2066 = vshrl.u32 %v2065, 7
    %v2067 = vsub.s32 0, %v2066
    %v2068 = vrot.slane %v2064, %v2067
    %v2073 = vunpack.c.l.b16 %v2060
    %v2074 = vunpack.c.l.b16 %v2061
    %v2075 = vunpack.c.l.b16 %v2062
    %v2076 = vunpack.c.l.b16 %v2063
    %v2077 = vpack.c.b16 %v2074, %v2073
    %v2078 = vpack.c.b16 %v2076, %v2075
    %v2082 = vsel %vm114, %v2058, 0
    %v2085 = vsel %vm114, %v2059, 0
    %2087 = vmatprep.subr.bf16.mxu0 0
    %2088 = vmatpush1.bf16.msra.mxu0 %v2077
    %2089 = vmatprep.subr.bf16.mxu0 0
    %2090 = vmatpush1.bf16.msra.mxu0 %v2078
    %2091 = vmatprep.subr.bf16.mxu0 0
    %2092 = vmatpush1.bf16.msra.mxu0 0
    %2093 = vmatprep.subr.bf16.mxu0 0
    %2094 = vmatpush1.bf16.msra.mxu0 0
    %2095 = vmatprep.subr.bf16.mxu0 0
    %2096 = vmatpush1.bf16.msra.mxu0 0
    %2097 = vmatprep.subr.bf16.mxu0 0
    %2098 = vmatpush1.bf16.msra.mxu0 0
    %2099 = vmatprep.subr.bf16.mxu0 0
    %2100 = vmatpush1.bf16.msra.mxu0 0
    %2101 = vmatprep.subr.bf16.mxu0 0
    %2102 = vmatpush1.bf16.msra.mxu0 0
    %2103 = vmatprep.subr.bf16.mxu0 0
    %2104 = vmatpush1.bf16.msra.mxu0 0
    %2105 = vmatprep.subr.bf16.mxu0 0
    %2106 = vmatpush1.bf16.msra.mxu0 0
    %2107 = vmatprep.subr.bf16.mxu0 0
    %2108 = vmatpush1.bf16.msra.mxu0 0
    %2109 = vmatprep.subr.bf16.mxu0 0
    %2110 = vmatpush1.bf16.msra.mxu0 0
    %2111 = vmatprep.subr.bf16.mxu0 0
    %2112 = vmatpush1.bf16.msra.mxu0 0
    %2113 = vmatprep.subr.bf16.mxu0 0
    %2114 = vmatpush1.bf16.msra.mxu0 0
    %2115 = vmatprep.subr.bf16.mxu0 0
    %2116 = vmatpush1.bf16.msra.mxu0 0
    %2117 = vmatprep.subr.bf16.mxu0 0
    %2118 = vmatpush1.bf16.msra.mxu0 0
    %2119 = vmatprep.mubr.bf16.mxu0 0
    %2120 = vmatmul.mubr.bf16.gmra.mrb[0].mxu0 %v2082
    %v2121 = vpop.f32.mrb[0].mxu0
    %v2122 = vadd.f32 %v2068, %v2121
    %v2123 = vpop.f32.mrb[0].mxu0
    %v2124 = vpop.f32.mrb[0].mxu0
    %v2125 = vadd.f32 %v2068, %v2124
    %v2126 = vpop.f32.mrb[0].mxu0
    %2127 = vmatprep.mubr.bf16.mxu0 0
    %2128 = vmatmul.mubr.bf16.gmra.mrb[0].mxu0 %v2085
    %v2129 = vpop.f32.mrb[0].mxu0
    %v2130 = vadd.f32 %v2068, %v2129
    %v2131 = vpop.f32.mrb[0].mxu0
    %v2132 = vpop.f32.mrb[0].mxu0
    %v2133 = vadd.f32 %v2068, %v2132
    %v2134 = vpop.f32.mrb[0].mxu0
    %2135 = vdwg.mxu0
    %v2136 = vadd.f32 %v2122, %v85
    %v2137 = vadd.f32 %v2125, %v86
    %v2138 = vadd.f32 %v2130, %v87
    %v2139 = vadd.f32 %v2133, %v88
    %v2140 = vld [vmem:[%s7 + $0x1] sm:$0x1]
    %v2141 = vld [vmem:[%s7 + $0x2] sm:$0x1]
    %v2142 = vsel %vm114, %v2136, 0.0
    %2143 = vadd.xlane.f32.xlu0 %v2142
    %v2144 = vpop.xlane.xlu0 %2143
    %v2145 = vsel %vm114, %v2137, 0.0
    %2146 = vadd.xlane.f32.xlu0 %v2145
    %v2147 = vpop.xlane.xlu0 %2146
    %v2148 = vsel %vm114, %v2138, 0.0
    %2149 = vadd.xlane.f32.xlu0 %v2148
    %v2150 = vpop.xlane.xlu0 %2149
    %v2151 = vsel %vm114, %v2139, 0.0
    %2152 = vadd.xlane.f32.xlu0 %v2151
    %v2153 = vpop.xlane.xlu0 %2152
    %v2154 = vrcp.pop 32.0
    %v2155 = vmul.f32 %v2144, %v2154
    %v2156 = vmul.f32 %v2147, %v2154
    %v2157 = vmul.f32 %v2150, %v2154
    %v2158 = vmul.f32 %v2153, %v2154
    %v2159 = vsub.f32 %v2136, %v2155
    %v2160 = vsub.f32 %v2137, %v2156
    %v2161 = vsub.f32 %v2138, %v2157
    %v2162 = vsub.f32 %v2139, %v2158
    %v2163 = vmul.f32 %v2159, %v2159
    %v2164 = vmul.f32 %v2160, %v2160
    %v2165 = vmul.f32 %v2161, %v2161
    %v2166 = vmul.f32 %v2162, %v2162
    %v2167 = vsel %vm114, %v2163, 0.0
    %2168 = vadd.xlane.f32.xlu0 %v2167
    %v2169 = vpop.xlane.xlu0 %2168
    %v2170 = vsel %vm114, %v2164, 0.0
    %2171 = vadd.xlane.f32.xlu0 %v2170
    %v2172 = vpop.xlane.xlu0 %2171
    %v2173 = vsel %vm114, %v2165, 0.0
    %2174 = vadd.xlane.f32.xlu0 %v2173
    %v2175 = vpop.xlane.xlu0 %2174
    %v2176 = vsel %vm114, %v2166, 0.0
    %2177 = vadd.xlane.f32.xlu0 %v2176
    %v2178 = vpop.xlane.xlu0 %2177
    %v2179 = vmul.f32 %v2169, %v2154
    %v2180 = vmul.f32 %v2172, %v2154
    %v2181 = vmul.f32 %v2175, %v2154
    %v2182 = vmul.f32 %v2178, %v2154
    %v2183 = vadd.f32 %v2179, 1e-05
    %v2184 = vadd.f32 %v2180, 1e-05
    %v2185 = vadd.f32 %v2181, 1e-05
    %v2186 = vadd.f32 %v2182, 1e-05
    %v2187 = vrsqrt.pop %v2183
    %v2188 = vrsqrt.pop %v2184
    %v2189 = vrsqrt.pop %v2185
    %v2190 = vrsqrt.pop %v2186
    %v2191 = vmul.f32 %v2159, %v2187
    %v2192 = vmul.f32 %v2160, %v2188
    %v2193 = vmul.f32 %v2161, %v2189
    %v2194 = vmul.f32 %v2162, %v2190
    %v2195 = vlaneseq
    %v2196 = vshrl.u32 %v2195, 7
    %v2197 = vsub.s32 0, %v2196
    %v2198 = vrot.slane %v2140, %v2197
    %v2199 = vmul.f32 %v2191, %v2198
    %v2200 = vmul.f32 %v2192, %v2198
    %v2201 = vmul.f32 %v2193, %v2198
    %v2202 = vmul.f32 %v2194, %v2198
    %v2203 = vlaneseq
    %v2204 = vshrl.u32 %v2203, 7
    %v2205 = vsub.s32 0, %v2204
    %v2206 = vrot.slane %v2141, %v2205
    %v2207 = vadd.f32 %v2199, %v2206
    %v2208 = vadd.f32 %v2200, %v2206
    %v2209 = vadd.f32 %v2201, %v2206
    %v2210 = vadd.f32 %v2202, %v2206
    %v2211 = vpack.c.bf16 %v2208, %v2207
    %v2212 = vpack.c.bf16 %v2210, %v2209
    %v2213 = vld [vmem:[#allocation7] sm:$0xf]
    %v2214 = vld [vmem:[#allocation7 + $0x4] sm:$0xf]
    %v2215 = vld [vmem:[#allocation7 + $0x8] sm:$0xf]
    %v2216 = vld [vmem:[#allocation7 + $0xc] sm:$0xf]
    %v2217 = vld [vmem:[#allocation8] sm:$0x1]
    %v2219 = vlaneseq
    %v2220 = vshrl.u32 %v2219, 7
    %v2221 = vsub.s32 0, %v2220
    %v2222 = vrot.slane %v2217, %v2221
    %v2228 = vunpack.c.l.b16 %v2213
    %v2229 = vunpack.c.l.b16 %v2214
    %v2230 = vunpack.c.l.b16 %v2215
    %v2231 = vunpack.c.l.b16 %v2216
    %v2232 = vpack.c.b16 %v2229, %v2228
    %v2233 = vpack.c.b16 %v2231, %v2230
    %v2237 = vsel %vm114, %v2211, 0
    %v2240 = vsel %vm114, %v2212, 0
    %2242 = vmatprep.subr.bf16.mxu0 0
    %2243 = vmatpush1.bf16.msra.mxu0 %v2232
    %2244 = vmatprep.subr.bf16.mxu0 0
    %2245 = vmatpush1.bf16.msra.mxu0 %v2233
    %2246 = vmatprep.subr.bf16.mxu0 0
    %2247 = vmatpush1.bf16.msra.mxu0 0
    %2248 = vmatprep.subr.bf16.mxu0 0
    %2249 = vmatpush1.bf16.msra.mxu0 0
    %2250 = vmatprep.subr.bf16.mxu0 0
    %2251 = vmatpush1.bf16.msra.mxu0 0
    %2252 = vmatprep.subr.bf16.mxu0 0
    %2253 = vmatpush1.bf16.msra.mxu0 0
    %2254 = vmatprep.subr.bf16.mxu0 0
    %2255 = vmatpush1.bf16.msra.mxu0 0
    %2256 = vmatprep.subr.bf16.mxu0 0
    %2257 = vmatpush1.bf16.msra.mxu0 0
    %2258 = vmatprep.subr.bf16.mxu0 0
    %2259 = vmatpush1.bf16.msra.mxu0 0
    %2260 = vmatprep.subr.bf16.mxu0 0
    %2261 = vmatpush1.bf16.msra.mxu0 0
    %2262 = vmatprep.subr.bf16.mxu0 0
    %2263 = vmatpush1.bf16.msra.mxu0 0
    %2264 = vmatprep.subr.bf16.mxu0 0
    %2265 = vmatpush1.bf16.msra.mxu0 0
    %2266 = vmatprep.subr.bf16.mxu0 0
    %2267 = vmatpush1.bf16.msra.mxu0 0
    %2268 = vmatprep.subr.bf16.mxu0 0
    %2269 = vmatpush1.bf16.msra.mxu0 0
    %2270 = vmatprep.subr.bf16.mxu0 0
    %2271 = vmatpush1.bf16.msra.mxu0 0
    %2272 = vmatprep.subr.bf16.mxu0 0
    %2273 = vmatpush1.bf16.msra.mxu0 0
    %2274 = vmatprep.mubr.bf16.mxu0 0
    %2275 = vmatmul.mubr.bf16.gmra.mrb[0].mxu0 %v2237
    %v2276 = vpop.f32.mrb[0].mxu0
    %v2277 = vadd.f32 %v2222, %v2276
    %v2278 = vpop.f32.mrb[0].mxu0
    %v2279 = vpop.f32.mrb[0].mxu0
    %v2280 = vadd.f32 %v2222, %v2279
    %v2281 = vpop.f32.mrb[0].mxu0
    %2282 = vmatprep.mubr.bf16.mxu0 0
    %2283 = vmatmul.mubr.bf16.gmra.mrb[0].mxu0 %v2240
    %v2284 = vpop.f32.mrb[0].mxu0
    %v2285 = vadd.f32 %v2222, %v2284
    %v2286 = vpop.f32.mrb[0].mxu0
    %v2287 = vpop.f32.mrb[0].mxu0
    %v2288 = vadd.f32 %v2222, %v2287
    %v2289 = vpop.f32.mrb[0].mxu0
    %2290 = vdwg.mxu0
    %v2291 = vmax.f32 %v2277, 0.0
    %v2292 = vmax.f32 %v2280, 0.0
    %v2293 = vmax.f32 %v2285, 0.0
    %v2294 = vmax.f32 %v2288, 0.0
    %v2295 = vpack.c.bf16 %v2292, %v2291
    %v2296 = vpack.c.bf16 %v2294, %v2293
    %v2297 = vld [vmem:[%s6] sm:$0xf]
    %v2298 = vld [vmem:[%s6 + $0x4] sm:$0xf]
    %v2299 = vld [vmem:[%s6 + $0x8] sm:$0xf]
    %v2300 = vld [vmem:[%s6 + $0xc] sm:$0xf]
    %v2301 = vld [vmem:[%s6 + $0x10] sm:$0xf]
    %v2302 = vld [vmem:[%s6 + $0x14] sm:$0xf]
    %v2303 = vld [vmem:[%s6 + $0x18] sm:$0xf]
    %v2304 = vld [vmem:[%s6 + $0x1c] sm:$0xf]
    %v2305 = vld [vmem:[%s7 + $0x3] sm:$0x1]
    %v2306 = vlaneseq
    %v2307 = vshrl.u32 %v2306, 7
    %v2308 = vsub.s32 0, %v2307
    %v2309 = vrot.slane %v2305, %v2308
    %v2318 = vunpack.c.l.b16 %v2297
    %v2319 = vunpack.c.l.b16 %v2298
    %v2320 = vunpack.c.l.b16 %v2299
    %v2321 = vunpack.c.l.b16 %v2300
    %v2322 = vunpack.c.l.b16 %v2301
    %v2323 = vunpack.c.l.b16 %v2302
    %v2324 = vunpack.c.l.b16 %v2303
    %v2325 = vunpack.c.l.b16 %v2304
    %v2326 = vpack.c.b16 %v2319, %v2318
    %v2327 = vpack.c.b16 %v2321, %v2320
    %v2328 = vpack.c.b16 %v2323, %v2322
    %v2329 = vpack.c.b16 %v2325, %v2324
    %vm2334 = vcmask 523264
    %v2336 = vsel %vm2334, %v2295, 0
    %v2339 = vsel %vm2334, %v2296, 0
    %2341 = vmatprep.subr.bf16.mxu0 0
    %2342 = vmatpush1.bf16.msra.mxu0 %v2326
    %2343 = vmatprep.subr.bf16.mxu0 0
    %2344 = vmatpush1.bf16.msra.mxu0 %v2327
    %2345 = vmatprep.subr.bf16.mxu0 0
    %2346 = vmatpush1.bf16.msra.mxu0 %v2328
    %2347 = vmatprep.subr.bf16.mxu0 0
    %2348 = vmatpush1.bf16.msra.mxu0 %v2329
    %2349 = vmatprep.subr.bf16.mxu0 0
    %2350 = vmatpush1.bf16.msra.mxu0 0
    %2351 = vmatprep.subr.bf16.mxu0 0
    %2352 = vmatpush1.bf16.msra.mxu0 0
    %2353 = vmatprep.subr.bf16.mxu0 0
    %2354 = vmatpush1.bf16.msra.mxu0 0
    %2355 = vmatprep.subr.bf16.mxu0 0
    %2356 = vmatpush1.bf16.msra.mxu0 0
    %2357 = vmatprep.subr.bf16.mxu0 0
    %2358 = vmatpush1.bf16.msra.mxu0 0
    %2359 = vmatprep.subr.bf16.mxu0 0
    %2360 = vmatpush1.bf16.msra.mxu0 0
    %2361 = vmatprep.subr.bf16.mxu0 0
    %2362 = vmatpush1.bf16.msra.mxu0 0
    %2363 = vmatprep.subr.bf16.mxu0 0
    %2364 = vmatpush1.bf16.msra.mxu0 0
    %2365 = vmatprep.subr.bf16.mxu0 0
    %2366 = vmatpush1.bf16.msra.mxu0 0
    %2367 = vmatprep.subr.bf16.mxu0 0
    %2368 = vmatpush1.bf16.msra.mxu0 0
    %2369 = vmatprep.subr.bf16.mxu0 0
    %2370 = vmatpush1.bf16.msra.mxu0 0
    %2371 = vmatprep.subr.bf16.mxu0 0
    %2372 = vmatpush1.bf16.msra.mxu0 0
    %2373 = vmatprep.mubr.bf16.mxu0 0
    %2374 = vmatmul.mubr.bf16.gmra.mrb[0].mxu0 %v2336
    %v2375 = vpop.f32.mrb[0].mxu0
    %v2376 = vadd.f32 %v2309, %v2375
    %v2377 = vpop.f32.mrb[0].mxu0
    %v2378 = vpop.f32.mrb[0].mxu0
    %v2379 = vadd.f32 %v2309, %v2378
    %v2380 = vpop.f32.mrb[0].mxu0
    %2381 = vmatprep.mubr.bf16.mxu0 0
    %2382 = vmatmul.mubr.bf16.gmra.mrb[0].mxu0 %v2339
    %v2383 = vpop.f32.mrb[0].mxu0
    %v2384 = vadd.f32 %v2309, %v2383
    %v2385 = vpop.f32.mrb[0].mxu0
    %v2386 = vpop.f32.mrb[0].mxu0
    %v2387 = vadd.f32 %v2309, %v2386
    %v2388 = vpop.f32.mrb[0].mxu0
    %2389 = vdwg.mxu0
    %v2390 = vadd.f32 %v2376, %v2207
    %v2391 = vadd.f32 %v2379, %v2208
    %v2392 = vadd.f32 %v2384, %v2209
    %v2393 = vadd.f32 %v2387, %v2210
    %v2394 = vld [vmem:[%s7 + $0x4] sm:$0x1]
    %v2395 = vld [vmem:[%s7 + $0x5] sm:$0x1]
    %v2396 = vsel %vm114, %v2390, 0.0
    %2397 = vadd.xlane.f32.xlu0 %v2396
    %v2398 = vpop.xlane.xlu0 %2397
    %v2399 = vsel %vm114, %v2391, 0.0
    %2400 = vadd.xlane.f32.xlu0 %v2399
    %v2401 = vpop.xlane.xlu0 %2400
    %v2402 = vsel %vm114, %v2392, 0.0
    %2403 = vadd.xlane.f32.xlu0 %v2402
    %v2404 = vpop.xlane.xlu0 %2403
    %v2405 = vsel %vm114, %v2393, 0.0
    %2406 = vadd.xlane.f32.xlu0 %v2405
    %v2407 = vpop.xlane.xlu0 %2406
    %v2408 = vmul.f32 %v2398, %v2154
    %v2409 = vmul.f32 %v2401, %v2154
    %v2410 = vmul.f32 %v2404, %v2154
    %v2411 = vmul.f32 %v2407, %v2154
    %v2412 = vsub.f32 %v2390, %v2408
    %v2413 = vsub.f32 %v2391, %v2409
    %v2414 = vsub.f32 %v2392, %v2410
    %v2415 = vsub.f32 %v2393, %v2411
    %v2416 = vmul.f32 %v2412, %v2412
    %v2417 = vmul.f32 %v2413, %v2413
    %v2418 = vmul.f32 %v2414, %v2414
    %v2419 = vmul.f32 %v2415, %v2415
    %v2420 = vsel %vm114, %v2416, 0.0
    %2421 = vadd.xlane.f32.xlu0 %v2420
    %v2422 = vpop.xlane.xlu0 %2421
    %v2423 = vsel %vm114, %v2417, 0.0
    %2424 = vadd.xlane.f32.xlu0 %v2423
    %v2425 = vpop.xlane.xlu0 %2424
    %v2426 = vsel %vm114, %v2418, 0.0
    %2427 = vadd.xlane.f32.xlu0 %v2426
    %v2428 = vpop.xlane.xlu0 %2427
    %v2429 = vsel %vm114, %v2419, 0.0
    %2430 = vadd.xlane.f32.xlu0 %v2429
    %v2431 = vpop.xlane.xlu0 %2430
    %v2432 = vmul.f32 %v2422, %v2154
    %v2433 = vmul.f32 %v2425, %v2154
    %v2434 = vmul.f32 %v2428, %v2154
    %v2435 = vmul.f32 %v2431, %v2154
    %v2436 = vadd.f32 %v2432, 1e-05
    %v2437 = vadd.f32 %v2433, 1e-05
    %v2438 = vadd.f32 %v2434, 1e-05
    %v2439 = vadd.f32 %v2435, 1e-05
    %v2440 = vrsqrt.pop %v2436
    %v2441 = vrsqrt.pop %v2437
    %v2442 = vrsqrt.pop %v2438
    %v2443 = vrsqrt.pop %v2439
    %v2444 = vmul.f32 %v2412, %v2440
    %v2445 = vmul.f32 %v2413, %v2441
    %v2446 = vmul.f32 %v2414, %v2442
    %v2447 = vmul.f32 %v2415, %v2443
    %v2448 = vlaneseq
    %v2449 = vshrl.u32 %v2448, 7
    %v2450 = vsub.s32 0, %v2449
    %v2451 = vrot.slane %v2394, %v2450
    %v2452 = vmul.f32 %v2444, %v2451
    %v2453 = vmul.f32 %v2445, %v2451
    %v2454 = vmul.f32 %v2446, %v2451
    %v2455 = vmul.f32 %v2447, %v2451
    %v2456 = vlaneseq
    %v2457 = vshrl.u32 %v2456, 7
    %v2458 = vsub.s32 0, %v2457
    %v2459 = vrot.slane %v2395, %v2458
    %v2460 = vadd.f32 %v2452, %v2459
    %v2461 = vadd.f32 %v2453, %v2459
    %v2462 = vadd.f32 %v2454, %v2459
    %v2463 = vadd.f32 %v2455, %v2459
    %2464 = vst.msk [vmem:[#allocation10] sm:$0xff] %vm114, %v2460
    %2465 = vst.msk [vmem:[#allocation10 + $0x8] sm:$0xff] %vm114, %v2461
    %2466 = vst.msk [vmem:[#allocation10 + $0x10] sm:$0xff] %vm114, %v2462
    %2467 = vst.msk [vmem:[#allocation10 + $0x18] sm:$0xff] %vm114, %v2463
    // Predicated region
    $region54: #{tpu_custom_call.1} parent=1 // pred_check
      _
    $region55: #{tpu_custom_call.1} parent=1 // pred_check_branch
      %2469 = sbr.rel (0) target = $region57
    $region56: #{tpu_custom_call.1} parent=1 // pred_region
      %s2471 = ssub.s32 512, 512
      %2472 = vsyncadd [#allocation4], %s2471
      %s2473 = sshll.u32 [#allocation10], 4
      %s2474 = int_to_ptr.vmem [resolvable:$true] %s2473
      %2479 = dma.vmem_to_hbm [thread:$0]  %s2474, 512, %s9, [#allocation4], 128, 128, 8
    $region57: #{tpu_custom_call.1} parent=1 // pred_fallthru
      _
    // Predicated region
    $region58: #{tpu_custom_call.1} parent=1 // pred_check
      _
    $region59: #{tpu_custom_call.1} parent=1 // pred_check_branch
      %2481 = sbr.rel (0) target = $region61
    $region60: #{tpu_custom_call.1} parent=1 // pred_region
      %2482 = dma.done [#allocation4], 512
    $region61: #{tpu_custom_call.1} parent=1 // pred_fallthru
      _
    %2483 = vsyncpa [#allocation3], 1
    %2484 = vsyncpa [#allocation6], 1
    %2485 = vsyncpa [#allocation9], 1
    %2486 = vsyncpa [#allocation4], 1

</llo_original>
